<compile_context>
chip_gen: v7x
topology: tpu7x:2x2x1
jax: 0.10.0
libtpu: 0.0.40
codegen_flags: <defaults>
</compile_context>

<pallas_src>
import functools

import jax
import jax.numpy as jnp
from jax import lax
from jax.experimental import pallas as pl
from jax.experimental.pallas import tpu as pltpu


def _pick_time_block(seq_len, hidden_size, max_block=64):
    """Pick a time block TB that amortizes per-grid-step overhead and keeps both the
    (B, TB, F) input tile and the flattened (B, TB*H) output tile (8,128)-friendly.
    Awkward sequence lengths are handled by padding T (never by unrolling all of T)."""
    if seq_len <= max_block:
        return seq_len                       # single block covering the whole sequence
    tb = max_block
    while (tb % 8 != 0) or (tb * hidden_size) % 128 != 0:
        tb += 1
    return tb


def _lstm_kernel(x_ref, wih_ref, bias_ref, h0_ref, c0_ref, whh_ref,
                 out_ref, hn_ref, cn_ref,
                 h_scr, c_scr,
                 *, hidden_size, block_t, seq_len, needs_mask):
    """One grid step = TB consecutive LSTM timesteps (statically unrolled).

    The g-gate columns of wih/whh/bias were pre-scaled by 2 in the wrapper, so the
    per-step activation is a single full-width sigmoid; g = 2*sig_g - 1 (== tanh)."""
    H = hidden_size
    TB = block_t
    G = 4 * H
    B = h0_ref.shape[0]
    F = x_ref.shape[-1]
    blk = pl.program_id(0)

    # Load the recurrent state from (h0, c0) on the very first block.
    @pl.when(blk == 0)
    def _():
        h_scr[...] = h0_ref[...]
        c_scr[...] = c0_ref[...]

    # Fused block-level input projection: one (B*TB, F) @ (F, 4H) MXU matmul per grid
    # step (no sequential dependence), bias folded in.  Replaces the wrapper-side
    # gates_x materialization (4H-wide) and its HBM round trip.
    x_blk = x_ref[...].reshape(B * TB, F)
    gx = jnp.dot(x_blk, wih_ref[...], preferred_element_type=jnp.float32)   # (B*TB, 4H)
    gx_blk = gx.reshape(B, TB, G) + bias_ref[...]                           # (B, TB, 4H)

    whh = whh_ref[...]          # (H, 4H), resident in VMEM across all grid steps
    h = h_scr[...]              # (B, H) f32 carry
    c = c_scr[...]              # (B, H) f32 carry

    # Statically-unrolled inner loop: only h @ W_hh^T + activations remain on the
    # sequential critical path.  All ref/array slices below use static indices.
    for s in range(TB):
        gates = gx_blk[:, s, :] + jnp.dot(h, whh,
                                          preferred_element_type=jnp.float32)  # (B, 4H)

        sig = jax.nn.sigmoid(gates)                 # single full-width EUP pass
        i_g = sig[:, 0 * H:1 * H]
        f_g = sig[:, 1 * H:2 * H]
        g_g = 2.0 * sig[:, 2 * H:3 * H] - 1.0       # == tanh(pre_g); VPU-only
        o_g = sig[:, 3 * H:4 * H]

        c_new = f_g * c + i_g * g_g
        h_new = o_g * jnp.tanh(c_new)               # EUP over H lanes only

        if needs_mask:
            # Only emitted when T was padded: keep carries frozen past the real end.
            valid = (blk * TB + s) < seq_len
            c = jnp.where(valid, c_new, c)
            h = jnp.where(valid, h_new, h)
        else:
            c = c_new
            h = h_new

        # Lane-dense store into the (B, TB*H) output block (padded tail is sliced
        # off in the wrapper, so no guard is needed here).
        out_ref[:, s * H:(s + 1) * H] = h

    h_scr[...] = h
    c_scr[...] = c
    # Unconditional per-block writes of the resident final-state outputs.
    hn_ref[...] = h
    cn_ref[...] = c


@functools.partial(jax.jit, static_argnames=("time_block",))
def memory_module_forward(attended, hidden, params, *, time_block=64):
    """Pallas equivalent of MemoryModule.forward(attended, hidden).

    attended: (B, T, F) float32
    hidden:   (h0, c0) each (1, B, H) float32   (num_layers * num_directions = 1)
    params:   (w_ih, w_hh, b_ih, b_hh) with shapes (4H, F), (4H, H), (4H,), (4H,)
    returns:  output (B, T, H), (h_n, c_n) each (1, B, H)
    """
    w_ih, w_hh, b_ih, b_hh = params
    B, T, F = attended.shape
    H = w_hh.shape[1]
    G = 4 * H

    # g-gate pre-scale for the tanh(x) = 2*sigmoid(2x) - 1 identity: scale the g-gate
    # columns of both transposed weight matrices and the fused bias by 2 at trace time.
    gate_scale = jnp.concatenate([
        jnp.ones((2 * H,), jnp.float32),
        jnp.full((H,), 2.0, jnp.float32),
        jnp.ones((H,), jnp.float32),
    ])
    w_ih_t = w_ih.T.astype(jnp.float32) * gate_scale[None, :]            # (F, 4H)
    w_hh_t = w_hh.T.astype(jnp.float32) * gate_scale[None, :]            # (H, 4H)
    bias = ((b_ih + b_hh).astype(jnp.float32) * gate_scale)[None, :]     # (1, 4H)

    TB = _pick_time_block(T, H, time_block)
    n_blocks = -(-T // TB)          # cdiv
    T_pad = n_blocks * TB

    x = attended.astype(jnp.float32)
    if T_pad != T:
        x = jnp.pad(x, ((0, 0), (0, T_pad - T), (0, 0)))

    h0 = hidden[0][0].astype(jnp.float32)                                # (B, H)
    c0 = hidden[1][0].astype(jnp.float32)                                # (B, H)

    kernel = functools.partial(_lstm_kernel, hidden_size=H, block_t=TB,
                               seq_len=T, needs_mask=(T_pad != T))

    out_flat, h_n, c_n = pl.pallas_call(
        kernel,
        out_shape=(
            jax.ShapeDtypeStruct((B, T_pad * H), jnp.float32),   # lane-dense output
            jax.ShapeDtypeStruct((B, H), jnp.float32),           # h_n
            jax.ShapeDtypeStruct((B, H), jnp.float32),           # c_n
        ),
        grid_spec=pltpu.PrefetchScalarGridSpec(
            num_scalar_prefetch=0,
            grid=(n_blocks,),
            in_specs=[
                pl.BlockSpec((B, TB, F), lambda i: (0, i, 0)),   # x time-tile
                pl.BlockSpec((F, G), lambda i: (0, 0)),          # W_ih^T (resident)
                pl.BlockSpec((1, G), lambda i: (0, 0)),          # fused, pre-scaled bias
                pl.BlockSpec((B, H), lambda i: (0, 0)),          # h0
                pl.BlockSpec((B, H), lambda i: (0, 0)),          # c0
                pl.BlockSpec((H, G), lambda i: (0, 0)),          # W_hh^T (resident)
            ],
            out_specs=[
                pl.BlockSpec((B, TB * H), lambda i: (0, i)),     # lane-dense out tile
                pl.BlockSpec((B, H), lambda i: (0, 0)),          # h_n (resident)
                pl.BlockSpec((B, H), lambda i: (0, 0)),          # c_n (resident)
            ],
            scratch_shapes=[
                pltpu.VMEM((B, H), jnp.float32),                 # h carry
                pltpu.VMEM((B, H), jnp.float32),                 # c carry
            ],
        ),
        compiler_params=pltpu.CompilerParams(
            dimension_semantics=("arbitrary",),                  # recurrence is sequential
        ),
    )(x, w_ih_t, bias, h0, c0, w_hh_t)

    out = out_flat[:, :T * H].reshape(B, T, H)
    return out, (h_n[None], c_n[None])


def _reference_lstm(attended, hidden, params):
    """Pure-JAX reference replicating torch.nn.LSTM (1 layer, batch_first)."""
    w_ih, w_hh, b_ih, b_hh = params
    H = w_hh.shape[1]
    h0, c0 = hidden[0][0], hidden[1][0]

    def step(carry, x_t):
        h, c = carry
        gates = x_t @ w_ih.T + h @ w_hh.T + b_ih + b_hh
        i = jax.nn.sigmoid(gates[:, 0 * H:1 * H])
        f = jax.nn.sigmoid(gates[:, 1 * H:2 * H])
        g = jnp.tanh(gates[:, 2 * H:3 * H])
        o = jax.nn.sigmoid(gates[:, 3 * H:4 * H])
        c_new = f * c + i * g
        h_new = o * jnp.tanh(c_new)
        return (h_new, c_new), h_new

    (h_n, c_n), ys = lax.scan(step, (h0, c0), jnp.transpose(attended, (1, 0, 2)))
    return jnp.transpose(ys, (1, 0, 2)), (h_n[None], c_n[None])


if __name__ == "__main__":
    # Small shapes consistent with MemoryModule(feature_size=32, memory_size=32).
    B, T, FEAT, MEM = 2, 8, 32, 32

    key = jax.random.PRNGKey(0)
    k_x, k_h, k_c, k1, k2, k3, k4 = jax.random.split(key, 7)

    # Deterministic parameter init mirroring nn.LSTM's U(-1/sqrt(H), 1/sqrt(H)).
    bound = 1.0 / (MEM ** 0.5)
    w_ih = jax.random.uniform(k1, (4 * MEM, FEAT), jnp.float32, -bound, bound)
    w_hh = jax.random.uniform(k2, (4 * MEM, MEM), jnp.float32, -bound, bound)
    b_ih = jax.random.uniform(k3, (4 * MEM,), jnp.float32, -bound, bound)
    b_hh = jax.random.uniform(k4, (4 * MEM,), jnp.float32, -bound, bound)
    params = (w_ih, w_hh, b_ih, b_hh)

    attended = jax.random.normal(k_x, (B, T, FEAT), jnp.float32)
    h0 = jax.random.normal(k_h, (1, B, MEM), jnp.float32)
    c0 = jax.random.normal(k_c, (1, B, MEM), jnp.float32)
    hidden = (h0, c0)

    out, (h_n, c_n) = memory_module_forward(attended, hidden, params)
    out = jax.block_until_ready(out)
    h_n = jax.block_until_ready(h_n)
    c_n = jax.block_until_ready(c_n)

    # Sanity-check against a pure-JAX LSTM reference (exact f32 torch LSTM math).
    ref_out, (ref_h, ref_c) = _reference_lstm(attended, hidden, params)
    assert out.shape == (B, T, MEM) and h_n.shape == (1, B, MEM) and c_n.shape == (1, B, MEM)
    assert jnp.allclose(out, ref_out, atol=1e-5), "output mismatch"
    assert jnp.allclose(h_n, ref_h, atol=1e-5), "h_n mismatch"
    assert jnp.allclose(c_n, ref_c, atol=1e-5), "c_n mismatch"

    print("KERNEL_OK")
</pallas_src>

<mosaic_0001>
module attributes {stable_mosaic.version = 11 : i64} {
  func.func @_lstm_kernel(%arg0: i32, %arg1: memref<2x8x32xf32, #tpu.memory_space<vmem>>, %arg2: memref<32x128xf32, #tpu.memory_space<vmem>>, %arg3: memref<1x128xf32, #tpu.memory_space<vmem>>, %arg4: memref<2x32xf32, #tpu.memory_space<vmem>>, %arg5: memref<2x32xf32, #tpu.memory_space<vmem>>, %arg6: memref<32x128xf32, #tpu.memory_space<vmem>>, %arg7: memref<2x256xf32, #tpu.memory_space<vmem>>, %arg8: memref<2x32xf32, #tpu.memory_space<vmem>>, %arg9: memref<2x32xf32, #tpu.memory_space<vmem>>, %arg10: memref<2x32xf32, #tpu.memory_space<vmem>>, %arg11: memref<2x32xf32, #tpu.memory_space<vmem>>) attributes {dimension_semantics = [#tpu.dimension_semantics<arbitrary>], iteration_bounds = array<i64: 1>, scalar_prefetch = 0 : i64, scratch_operands = 2 : i64, tpu.core_type = #tpu.core_type<tc>, window_params = [{transform_indices = @transform_0, window_bounds = array<i64: 2, 8, 32>}, {pipeline_mode = #tpu.pipeline_mode<synchronous>, transform_indices = @transform_1, window_bounds = array<i64: 32, 128>}, {pipeline_mode = #tpu.pipeline_mode<synchronous>, transform_indices = @transform_2, window_bounds = array<i64: 1, 128>}, {pipeline_mode = #tpu.pipeline_mode<synchronous>, transform_indices = @transform_3, window_bounds = array<i64: 2, 32>}, {pipeline_mode = #tpu.pipeline_mode<synchronous>, transform_indices = @transform_4, window_bounds = array<i64: 2, 32>}, {pipeline_mode = #tpu.pipeline_mode<synchronous>, transform_indices = @transform_5, window_bounds = array<i64: 32, 128>}, {transform_indices = @transform_6, window_bounds = array<i64: 2, 256>}, {pipeline_mode = #tpu.pipeline_mode<synchronous>, transform_indices = @transform_7, window_bounds = array<i64: 2, 32>}, {pipeline_mode = #tpu.pipeline_mode<synchronous>, transform_indices = @transform_8, window_bounds = array<i64: 2, 32>}]} {
    %c0_i32 = arith.constant 0 : i32
    %0 = arith.cmpi eq, %arg0, %c0_i32 : i32
    %1 = arith.extui %0 : i1 to i32
    %c0_i32_0 = arith.constant 0 : i32
    %2 = arith.cmpi ne, %1, %c0_i32_0 : i32
    scf.if %2 {
      %c0_62 = arith.constant 0 : index
      %c0_63 = arith.constant 0 : index
      %203 = vector.load %arg4[%c0_62, %c0_63] : memref<2x32xf32, #tpu.memory_space<vmem>>, vector<2x32xf32>
      %c0_64 = arith.constant 0 : index
      %c0_65 = arith.constant 0 : index
      %204 = vector.load %arg10[%c0_64, %c0_65] : memref<2x32xf32, #tpu.memory_space<vmem>>, vector<2x32xf32>
      tpu.vector_store %arg10[%c0_64, %c0_65], %203 {strides = array<i32>} : memref<2x32xf32, #tpu.memory_space<vmem>>, vector<2x32xf32>,
      %c0_66 = arith.constant 0 : index
      %c0_67 = arith.constant 0 : index
      %205 = vector.load %arg5[%c0_66, %c0_67] : memref<2x32xf32, #tpu.memory_space<vmem>>, vector<2x32xf32>
      %c0_68 = arith.constant 0 : index
      %c0_69 = arith.constant 0 : index
      %206 = vector.load %arg11[%c0_68, %c0_69] : memref<2x32xf32, #tpu.memory_space<vmem>>, vector<2x32xf32>
      tpu.vector_store %arg11[%c0_68, %c0_69], %205 {strides = array<i32>} : memref<2x32xf32, #tpu.memory_space<vmem>>, vector<2x32xf32>,
    } else {
    }
    %c0 = arith.constant 0 : index
    %c0_1 = arith.constant 0 : index
    %c0_2 = arith.constant 0 : index
    %3 = vector.load %arg1[%c0, %c0_1, %c0_2] : memref<2x8x32xf32, #tpu.memory_space<vmem>>, vector<2x8x32xf32>
    %4 = vector.shape_cast %3 : vector<2x8x32xf32> to vector<16x32xf32>
    %c0_3 = arith.constant 0 : index
    %c0_4 = arith.constant 0 : index
    %5 = vector.load %arg2[%c0_3, %c0_4] : memref<32x128xf32, #tpu.memory_space<vmem>>, vector<32x128xf32>
    %cst = arith.constant dense<0.000000e+00> : vector<16x128xf32>
    %6 = tpu.matmul %4, %5, %cst {dimension_numbers = #tpu.dot_dimension_numbers<[1], [0], [0], [1], [0, 0, 1, 1], [], []>} : vector<16x32xf32>, vector<32x128xf32>, vector<16x128xf32> -> vector<16x128xf32>
    %7 = vector.shape_cast %6 : vector<16x128xf32> to vector<2x8x128xf32>
    %c0_5 = arith.constant 0 : index
    %c0_6 = arith.constant 0 : index
    %8 = vector.load %arg3[%c0_5, %c0_6] : memref<1x128xf32, #tpu.memory_space<vmem>>, vector<1x128xf32>
    %9 = vector.shape_cast %8 : vector<1x128xf32> to vector<1x1x128xf32>
    %10 = vector.broadcast %9 : vector<1x1x128xf32> to vector<2x8x128xf32>
    %11 = arith.addf %7, %10 : vector<2x8x128xf32>
    %c0_7 = arith.constant 0 : index
    %c0_8 = arith.constant 0 : index
    %12 = vector.load %arg6[%c0_7, %c0_8] : memref<32x128xf32, #tpu.memory_space<vmem>>, vector<32x128xf32>
    %c0_9 = arith.constant 0 : index
    %c0_10 = arith.constant 0 : index
    %13 = vector.load %arg10[%c0_9, %c0_10] : memref<2x32xf32, #tpu.memory_space<vmem>>, vector<2x32xf32>
    %c0_11 = arith.constant 0 : index
    %c0_12 = arith.constant 0 : index
    %14 = vector.load %arg11[%c0_11, %c0_12] : memref<2x32xf32, #tpu.memory_space<vmem>>, vector<2x32xf32>
    %15 = vector.extract_strided_slice %11 {offsets = [0, 0, 0], sizes = [2, 1, 128], strides = [1, 1, 1]} : vector<2x8x128xf32> to vector<2x1x128xf32>
    %16 = vector.shape_cast %15 : vector<2x1x128xf32> to vector<2x128xf32>
    %cst_13 = arith.constant dense<0.000000e+00> : vector<2x128xf32>
    %17 = tpu.matmul %13, %12, %cst_13 {dimension_numbers = #tpu.dot_dimension_numbers<[1], [0], [0], [1], [0, 0, 1, 1], [], []>} : vector<2x32xf32>, vector<32x128xf32>, vector<2x128xf32> -> vector<2x128xf32>
    %18 = arith.addf %16, %17 : vector<2x128xf32>
    %19 = arith.negf %18 : vector<2x128xf32>
    %20 = math.exp %19 : vector<2x128xf32>
    %cst_14 = arith.constant 1.000000e+00 : f32
    %21 = vector.broadcast %cst_14 : f32 to vector<2x128xf32>
    %22 = arith.addf %21, %20 : vector<2x128xf32>
    %23 = arith.divf %21, %22 : vector<2x128xf32>
    %24 = vector.extract_strided_slice %23 {offsets = [0, 0], sizes = [2, 32], strides = [1, 1]} : vector<2x128xf32> to vector<2x32xf32>
    %25 = vector.extract_strided_slice %23 {offsets = [0, 32], sizes = [2, 32], strides = [1, 1]} : vector<2x128xf32> to vector<2x32xf32>
    %26 = vector.extract_strided_slice %23 {offsets = [0, 64], sizes = [2, 32], strides = [1, 1]} : vector<2x128xf32> to vector<2x32xf32>
    %cst_15 = arith.constant 2.000000e+00 : f32
    %27 = vector.broadcast %cst_15 : f32 to vector<2x32xf32>
    %28 = arith.mulf %27, %26 : vector<2x32xf32>
    %cst_16 = arith.constant 1.000000e+00 : f32
    %29 = vector.broadcast %cst_16 : f32 to vector<2x32xf32>
    %30 = arith.subf %28, %29 : vector<2x32xf32>
    %31 = vector.extract_strided_slice %23 {offsets = [0, 96], sizes = [2, 32], strides = [1, 1]} : vector<2x128xf32> to vector<2x32xf32>
    %32 = arith.mulf %25, %14 : vector<2x32xf32>
    %33 = arith.mulf %24, %30 : vector<2x32xf32>
    %34 = arith.addf %32, %33 : vector<2x32xf32>
    %35 = math.tanh %34 : vector<2x32xf32>
    %36 = arith.mulf %31, %35 : vector<2x32xf32>
    %c0_17 = arith.constant 0 : index
    %c0_18 = arith.constant 0 : index
    %37 = vector.load %arg7[%c0_17, %c0_18] : memref<2x256xf32, #tpu.memory_space<vmem>>, vector<2x32xf32>
    tpu.vector_store %arg7[%c0_17, %c0_18], %36 {strides = array<i32>} : memref<2x256xf32, #tpu.memory_space<vmem>>, vector<2x32xf32>,
    %38 = vector.extract_strided_slice %11 {offsets = [0, 1, 0], sizes = [2, 1, 128], strides = [1, 1, 1]} : vector<2x8x128xf32> to vector<2x1x128xf32>
    %39 = vector.shape_cast %38 : vector<2x1x128xf32> to vector<2x128xf32>
    %cst_19 = arith.constant dense<0.000000e+00> : vector<2x128xf32>
    %40 = tpu.matmul %36, %12, %cst_19 {dimension_numbers = #tpu.dot_dimension_numbers<[1], [0], [0], [1], [0, 0, 1, 1], [], []>} : vector<2x32xf32>, vector<32x128xf32>, vector<2x128xf32> -> vector<2x128xf32>
    %41 = arith.addf %39, %40 : vector<2x128xf32>
    %42 = arith.negf %41 : vector<2x128xf32>
    %43 = math.exp %42 : vector<2x128xf32>
    %cst_20 = arith.constant 1.000000e+00 : f32
    %44 = vector.broadcast %cst_20 : f32 to vector<2x128xf32>
    %45 = arith.addf %44, %43 : vector<2x128xf32>
    %46 = arith.divf %44, %45 : vector<2x128xf32>
    %47 = vector.extract_strided_slice %46 {offsets = [0, 0], sizes = [2, 32], strides = [1, 1]} : vector<2x128xf32> to vector<2x32xf32>
    %48 = vector.extract_strided_slice %46 {offsets = [0, 32], sizes = [2, 32], strides = [1, 1]} : vector<2x128xf32> to vector<2x32xf32>
    %49 = vector.extract_strided_slice %46 {offsets = [0, 64], sizes = [2, 32], strides = [1, 1]} : vector<2x128xf32> to vector<2x32xf32>
    %cst_21 = arith.constant 2.000000e+00 : f32
    %50 = vector.broadcast %cst_21 : f32 to vector<2x32xf32>
    %51 = arith.mulf %50, %49 : vector<2x32xf32>
    %cst_22 = arith.constant 1.000000e+00 : f32
    %52 = vector.broadcast %cst_22 : f32 to vector<2x32xf32>
    %53 = arith.subf %51, %52 : vector<2x32xf32>
    %54 = vector.extract_strided_slice %46 {offsets = [0, 96], sizes = [2, 32], strides = [1, 1]} : vector<2x128xf32> to vector<2x32xf32>
    %55 = arith.mulf %48, %34 : vector<2x32xf32>
    %56 = arith.mulf %47, %53 : vector<2x32xf32>
    %57 = arith.addf %55, %56 : vector<2x32xf32>
    %58 = math.tanh %57 : vector<2x32xf32>
    %59 = arith.mulf %54, %58 : vector<2x32xf32>
    %c0_23 = arith.constant 0 : index
    %c32 = arith.constant 32 : index
    %60 = vector.load %arg7[%c0_23, %c32] : memref<2x256xf32, #tpu.memory_space<vmem>>, vector<2x32xf32>
    tpu.vector_store %arg7[%c0_23, %c32], %59 {strides = array<i32>} : memref<2x256xf32, #tpu.memory_space<vmem>>, vector<2x32xf32>,
    %61 = vector.extract_strided_slice %11 {offsets = [0, 2, 0], sizes = [2, 1, 128], strides = [1, 1, 1]} : vector<2x8x128xf32> to vector<2x1x128xf32>
    %62 = vector.shape_cast %61 : vector<2x1x128xf32> to vector<2x128xf32>
    %cst_24 = arith.constant dense<0.000000e+00> : vector<2x128xf32>
    %63 = tpu.matmul %59, %12, %cst_24 {dimension_numbers = #tpu.dot_dimension_numbers<[1], [0], [0], [1], [0, 0, 1, 1], [], []>} : vector<2x32xf32>, vector<32x128xf32>, vector<2x128xf32> -> vector<2x128xf32>
    %64 = arith.addf %62, %63 : vector<2x128xf32>
    %65 = arith.negf %64 : vector<2x128xf32>
    %66 = math.exp %65 : vector<2x128xf32>
    %cst_25 = arith.constant 1.000000e+00 : f32
    %67 = vector.broadcast %cst_25 : f32 to vector<2x128xf32>
    %68 = arith.addf %67, %66 : vector<2x128xf32>
    %69 = arith.divf %67, %68 : vector<2x128xf32>
    %70 = vector.extract_strided_slice %69 {offsets = [0, 0], sizes = [2, 32], strides = [1, 1]} : vector<2x128xf32> to vector<2x32xf32>
    %71 = vector.extract_strided_slice %69 {offsets = [0, 32], sizes = [2, 32], strides = [1, 1]} : vector<2x128xf32> to vector<2x32xf32>
    %72 = vector.extract_strided_slice %69 {offsets = [0, 64], sizes = [2, 32], strides = [1, 1]} : vector<2x128xf32> to vector<2x32xf32>
    %cst_26 = arith.constant 2.000000e+00 : f32
    %73 = vector.broadcast %cst_26 : f32 to vector<2x32xf32>
    %74 = arith.mulf %73, %72 : vector<2x32xf32>
    %cst_27 = arith.constant 1.000000e+00 : f32
    %75 = vector.broadcast %cst_27 : f32 to vector<2x32xf32>
    %76 = arith.subf %74, %75 : vector<2x32xf32>
    %77 = vector.extract_strided_slice %69 {offsets = [0, 96], sizes = [2, 32], strides = [1, 1]} : vector<2x128xf32> to vector<2x32xf32>
    %78 = arith.mulf %71, %57 : vector<2x32xf32>
    %79 = arith.mulf %70, %76 : vector<2x32xf32>
    %80 = arith.addf %78, %79 : vector<2x32xf32>
    %81 = math.tanh %80 : vector<2x32xf32>
    %82 = arith.mulf %77, %81 : vector<2x32xf32>
    %c0_28 = arith.constant 0 : index
    %c64 = arith.constant 64 : index
    %83 = vector.load %arg7[%c0_28, %c64] : memref<2x256xf32, #tpu.memory_space<vmem>>, vector<2x32xf32>
    tpu.vector_store %arg7[%c0_28, %c64], %82 {strides = array<i32>} : memref<2x256xf32, #tpu.memory_space<vmem>>, vector<2x32xf32>,
    %84 = vector.extract_strided_slice %11 {offsets = [0, 3, 0], sizes = [2, 1, 128], strides = [1, 1, 1]} : vector<2x8x128xf32> to vector<2x1x128xf32>
    %85 = vector.shape_cast %84 : vector<2x1x128xf32> to vector<2x128xf32>
    %cst_29 = arith.constant dense<0.000000e+00> : vector<2x128xf32>
    %86 = tpu.matmul %82, %12, %cst_29 {dimension_numbers = #tpu.dot_dimension_numbers<[1], [0], [0], [1], [0, 0, 1, 1], [], []>} : vector<2x32xf32>, vector<32x128xf32>, vector<2x128xf32> -> vector<2x128xf32>
    %87 = arith.addf %85, %86 : vector<2x128xf32>
    %88 = arith.negf %87 : vector<2x128xf32>
    %89 = math.exp %88 : vector<2x128xf32>
    %cst_30 = arith.constant 1.000000e+00 : f32
    %90 = vector.broadcast %cst_30 : f32 to vector<2x128xf32>
    %91 = arith.addf %90, %89 : vector<2x128xf32>
    %92 = arith.divf %90, %91 : vector<2x128xf32>
    %93 = vector.extract_strided_slice %92 {offsets = [0, 0], sizes = [2, 32], strides = [1, 1]} : vector<2x128xf32> to vector<2x32xf32>
    %94 = vector.extract_strided_slice %92 {offsets = [0, 32], sizes = [2, 32], strides = [1, 1]} : vector<2x128xf32> to vector<2x32xf32>
    %95 = vector.extract_strided_slice %92 {offsets = [0, 64], sizes = [2, 32], strides = [1, 1]} : vector<2x128xf32> to vector<2x32xf32>
    %cst_31 = arith.constant 2.000000e+00 : f32
    %96 = vector.broadcast %cst_31 : f32 to vector<2x32xf32>
    %97 = arith.mulf %96, %95 : vector<2x32xf32>
    %cst_32 = arith.constant 1.000000e+00 : f32
    %98 = vector.broadcast %cst_32 : f32 to vector<2x32xf32>
    %99 = arith.subf %97, %98 : vector<2x32xf32>
    %100 = vector.extract_strided_slice %92 {offsets = [0, 96], sizes = [2, 32], strides = [1, 1]} : vector<2x128xf32> to vector<2x32xf32>
    %101 = arith.mulf %94, %80 : vector<2x32xf32>
    %102 = arith.mulf %93, %99 : vector<2x32xf32>
    %103 = arith.addf %101, %102 : vector<2x32xf32>
    %104 = math.tanh %103 : vector<2x32xf32>
    %105 = arith.mulf %100, %104 : vector<2x32xf32>
    %c0_33 = arith.constant 0 : index
    %c96 = arith.constant 96 : index
    %106 = vector.load %arg7[%c0_33, %c96] : memref<2x256xf32, #tpu.memory_space<vmem>>, vector<2x32xf32>
    tpu.vector_store %arg7[%c0_33, %c96], %105 {strides = array<i32>} : memref<2x256xf32, #tpu.memory_space<vmem>>, vector<2x32xf32>,
    %107 = vector.extract_strided_slice %11 {offsets = [0, 4, 0], sizes = [2, 1, 128], strides = [1, 1, 1]} : vector<2x8x128xf32> to vector<2x1x128xf32>
    %108 = vector.shape_cast %107 : vector<2x1x128xf32> to vector<2x128xf32>
    %cst_34 = arith.constant dense<0.000000e+00> : vector<2x128xf32>
    %109 = tpu.matmul %105, %12, %cst_34 {dimension_numbers = #tpu.dot_dimension_numbers<[1], [0], [0], [1], [0, 0, 1, 1], [], []>} : vector<2x32xf32>, vector<32x128xf32>, vector<2x128xf32> -> vector<2x128xf32>
    %110 = arith.addf %108, %109 : vector<2x128xf32>
    %111 = arith.negf %110 : vector<2x128xf32>
    %112 = math.exp %111 : vector<2x128xf32>
    %cst_35 = arith.constant 1.000000e+00 : f32
    %113 = vector.broadcast %cst_35 : f32 to vector<2x128xf32>
    %114 = arith.addf %113, %112 : vector<2x128xf32>
    %115 = arith.divf %113, %114 : vector<2x128xf32>
    %116 = vector.extract_strided_slice %115 {offsets = [0, 0], sizes = [2, 32], strides = [1, 1]} : vector<2x128xf32> to vector<2x32xf32>
    %117 = vector.extract_strided_slice %115 {offsets = [0, 32], sizes = [2, 32], strides = [1, 1]} : vector<2x128xf32> to vector<2x32xf32>
    %118 = vector.extract_strided_slice %115 {offsets = [0, 64], sizes = [2, 32], strides = [1, 1]} : vector<2x128xf32> to vector<2x32xf32>
    %cst_36 = arith.constant 2.000000e+00 : f32
    %119 = vector.broadcast %cst_36 : f32 to vector<2x32xf32>
    %120 = arith.mulf %119, %118 : vector<2x32xf32>
    %cst_37 = arith.constant 1.000000e+00 : f32
    %121 = vector.broadcast %cst_37 : f32 to vector<2x32xf32>
    %122 = arith.subf %120, %121 : vector<2x32xf32>
    %123 = vector.extract_strided_slice %115 {offsets = [0, 96], sizes = [2, 32], strides = [1, 1]} : vector<2x128xf32> to vector<2x32xf32>
    %124 = arith.mulf %117, %103 : vector<2x32xf32>
    %125 = arith.mulf %116, %122 : vector<2x32xf32>
    %126 = arith.addf %124, %125 : vector<2x32xf32>
    %127 = math.tanh %126 : vector<2x32xf32>
    %128 = arith.mulf %123, %127 : vector<2x32xf32>
    %c0_38 = arith.constant 0 : index
    %c128 = arith.constant 128 : index
    %129 = vector.load %arg7[%c0_38, %c128] : memref<2x256xf32, #tpu.memory_space<vmem>>, vector<2x32xf32>
    tpu.vector_store %arg7[%c0_38, %c128], %128 {strides = array<i32>} : memref<2x256xf32, #tpu.memory_space<vmem>>, vector<2x32xf32>,
    %130 = vector.extract_strided_slice %11 {offsets = [0, 5, 0], sizes = [2, 1, 128], strides = [1, 1, 1]} : vector<2x8x128xf32> to vector<2x1x128xf32>
    %131 = vector.shape_cast %130 : vector<2x1x128xf32> to vector<2x128xf32>
    %cst_39 = arith.constant dense<0.000000e+00> : vector<2x128xf32>
    %132 = tpu.matmul %128, %12, %cst_39 {dimension_numbers = #tpu.dot_dimension_numbers<[1], [0], [0], [1], [0, 0, 1, 1], [], []>} : vector<2x32xf32>, vector<32x128xf32>, vector<2x128xf32> -> vector<2x128xf32>
    %133 = arith.addf %131, %132 : vector<2x128xf32>
    %134 = arith.negf %133 : vector<2x128xf32>
    %135 = math.exp %134 : vector<2x128xf32>
    %cst_40 = arith.constant 1.000000e+00 : f32
    %136 = vector.broadcast %cst_40 : f32 to vector<2x128xf32>
    %137 = arith.addf %136, %135 : vector<2x128xf32>
    %138 = arith.divf %136, %137 : vector<2x128xf32>
    %139 = vector.extract_strided_slice %138 {offsets = [0, 0], sizes = [2, 32], strides = [1, 1]} : vector<2x128xf32> to vector<2x32xf32>
    %140 = vector.extract_strided_slice %138 {offsets = [0, 32], sizes = [2, 32], strides = [1, 1]} : vector<2x128xf32> to vector<2x32xf32>
    %141 = vector.extract_strided_slice %138 {offsets = [0, 64], sizes = [2, 32], strides = [1, 1]} : vector<2x128xf32> to vector<2x32xf32>
    %cst_41 = arith.constant 2.000000e+00 : f32
    %142 = vector.broadcast %cst_41 : f32 to vector<2x32xf32>
    %143 = arith.mulf %142, %141 : vector<2x32xf32>
    %cst_42 = arith.constant 1.000000e+00 : f32
    %144 = vector.broadcast %cst_42 : f32 to vector<2x32xf32>
    %145 = arith.subf %143, %144 : vector<2x32xf32>
    %146 = vector.extract_strided_slice %138 {offsets = [0, 96], sizes = [2, 32], strides = [1, 1]} : vector<2x128xf32> to vector<2x32xf32>
    %147 = arith.mulf %140, %126 : vector<2x32xf32>
    %148 = arith.mulf %139, %145 : vector<2x32xf32>
    %149 = arith.addf %147, %148 : vector<2x32xf32>
    %150 = math.tanh %149 : vector<2x32xf32>
    %151 = arith.mulf %146, %150 : vector<2x32xf32>
    %c0_43 = arith.constant 0 : index
    %c160 = arith.constant 160 : index
    %152 = vector.load %arg7[%c0_43, %c160] : memref<2x256xf32, #tpu.memory_space<vmem>>, vector<2x32xf32>
    tpu.vector_store %arg7[%c0_43, %c160], %151 {strides = array<i32>} : memref<2x256xf32, #tpu.memory_space<vmem>>, vector<2x32xf32>,
    %153 = vector.extract_strided_slice %11 {offsets = [0, 6, 0], sizes = [2, 1, 128], strides = [1, 1, 1]} : vector<2x8x128xf32> to vector<2x1x128xf32>
    %154 = vector.shape_cast %153 : vector<2x1x128xf32> to vector<2x128xf32>
    %cst_44 = arith.constant dense<0.000000e+00> : vector<2x128xf32>
    %155 = tpu.matmul %151, %12, %cst_44 {dimension_numbers = #tpu.dot_dimension_numbers<[1], [0], [0], [1], [0, 0, 1, 1], [], []>} : vector<2x32xf32>, vector<32x128xf32>, vector<2x128xf32> -> vector<2x128xf32>
    %156 = arith.addf %154, %155 : vector<2x128xf32>
    %157 = arith.negf %156 : vector<2x128xf32>
    %158 = math.exp %157 : vector<2x128xf32>
    %cst_45 = arith.constant 1.000000e+00 : f32
    %159 = vector.broadcast %cst_45 : f32 to vector<2x128xf32>
    %160 = arith.addf %159, %158 : vector<2x128xf32>
    %161 = arith.divf %159, %160 : vector<2x128xf32>
    %162 = vector.extract_strided_slice %161 {offsets = [0, 0], sizes = [2, 32], strides = [1, 1]} : vector<2x128xf32> to vector<2x32xf32>
    %163 = vector.extract_strided_slice %161 {offsets = [0, 32], sizes = [2, 32], strides = [1, 1]} : vector<2x128xf32> to vector<2x32xf32>
    %164 = vector.extract_strided_slice %161 {offsets = [0, 64], sizes = [2, 32], strides = [1, 1]} : vector<2x128xf32> to vector<2x32xf32>
    %cst_46 = arith.constant 2.000000e+00 : f32
    %165 = vector.broadcast %cst_46 : f32 to vector<2x32xf32>
    %166 = arith.mulf %165, %164 : vector<2x32xf32>
    %cst_47 = arith.constant 1.000000e+00 : f32
    %167 = vector.broadcast %cst_47 : f32 to vector<2x32xf32>
    %168 = arith.subf %166, %167 : vector<2x32xf32>
    %169 = vector.extract_strided_slice %161 {offsets = [0, 96], sizes = [2, 32], strides = [1, 1]} : vector<2x128xf32> to vector<2x32xf32>
    %170 = arith.mulf %163, %149 : vector<2x32xf32>
    %171 = arith.mulf %162, %168 : vector<2x32xf32>
    %172 = arith.addf %170, %171 : vector<2x32xf32>
    %173 = math.tanh %172 : vector<2x32xf32>
    %174 = arith.mulf %169, %173 : vector<2x32xf32>
    %c0_48 = arith.constant 0 : index
    %c192 = arith.constant 192 : index
    %175 = vector.load %arg7[%c0_48, %c192] : memref<2x256xf32, #tpu.memory_space<vmem>>, vector<2x32xf32>
    tpu.vector_store %arg7[%c0_48, %c192], %174 {strides = array<i32>} : memref<2x256xf32, #tpu.memory_space<vmem>>, vector<2x32xf32>,
    %176 = vector.extract_strided_slice %11 {offsets = [0, 7, 0], sizes = [2, 1, 128], strides = [1, 1, 1]} : vector<2x8x128xf32> to vector<2x1x128xf32>
    %177 = vector.shape_cast %176 : vector<2x1x128xf32> to vector<2x128xf32>
    %cst_49 = arith.constant dense<0.000000e+00> : vector<2x128xf32>
    %178 = tpu.matmul %174, %12, %cst_49 {dimension_numbers = #tpu.dot_dimension_numbers<[1], [0], [0], [1], [0, 0, 1, 1], [], []>} : vector<2x32xf32>, vector<32x128xf32>, vector<2x128xf32> -> vector<2x128xf32>
    %179 = arith.addf %177, %178 : vector<2x128xf32>
    %180 = arith.negf %179 : vector<2x128xf32>
    %181 = math.exp %180 : vector<2x128xf32>
    %cst_50 = arith.constant 1.000000e+00 : f32
    %182 = vector.broadcast %cst_50 : f32 to vector<2x128xf32>
    %183 = arith.addf %182, %181 : vector<2x128xf32>
    %184 = arith.divf %182, %183 : vector<2x128xf32>
    %185 = vector.extract_strided_slice %184 {offsets = [0, 0], sizes = [2, 32], strides = [1, 1]} : vector<2x128xf32> to vector<2x32xf32>
    %186 = vector.extract_strided_slice %184 {offsets = [0, 32], sizes = [2, 32], strides = [1, 1]} : vector<2x128xf32> to vector<2x32xf32>
    %187 = vector.extract_strided_slice %184 {offsets = [0, 64], sizes = [2, 32], strides = [1, 1]} : vector<2x128xf32> to vector<2x32xf32>
    %cst_51 = arith.constant 2.000000e+00 : f32
    %188 = vector.broadcast %cst_51 : f32 to vector<2x32xf32>
    %189 = arith.mulf %188, %187 : vector<2x32xf32>
    %cst_52 = arith.constant 1.000000e+00 : f32
    %190 = vector.broadcast %cst_52 : f32 to vector<2x32xf32>
    %191 = arith.subf %189, %190 : vector<2x32xf32>
    %192 = vector.extract_strided_slice %184 {offsets = [0, 96], sizes = [2, 32], strides = [1, 1]} : vector<2x128xf32> to vector<2x32xf32>
    %193 = arith.mulf %186, %172 : vector<2x32xf32>
    %194 = arith.mulf %185, %191 : vector<2x32xf32>
    %195 = arith.addf %193, %194 : vector<2x32xf32>
    %196 = math.tanh %195 : vector<2x32xf32>
    %197 = arith.mulf %192, %196 : vector<2x32xf32>
    %c0_53 = arith.constant 0 : index
    %c224 = arith.constant 224 : index
    %198 = vector.load %arg7[%c0_53, %c224] : memref<2x256xf32, #tpu.memory_space<vmem>>, vector<2x32xf32>
    tpu.vector_store %arg7[%c0_53, %c224], %197 {strides = array<i32>} : memref<2x256xf32, #tpu.memory_space<vmem>>, vector<2x32xf32>,
    %c0_54 = arith.constant 0 : index
    %c0_55 = arith.constant 0 : index
    %199 = vector.load %arg10[%c0_54, %c0_55] : memref<2x32xf32, #tpu.memory_space<vmem>>, vector<2x32xf32>
    tpu.vector_store %arg10[%c0_54, %c0_55], %197 {strides = array<i32>} : memref<2x32xf32, #tpu.memory_space<vmem>>, vector<2x32xf32>,
    %c0_56 = arith.constant 0 : index
    %c0_57 = arith.constant 0 : index
    %200 = vector.load %arg11[%c0_56, %c0_57] : memref<2x32xf32, #tpu.memory_space<vmem>>, vector<2x32xf32>
    tpu.vector_store %arg11[%c0_56, %c0_57], %195 {strides = array<i32>} : memref<2x32xf32, #tpu.memory_space<vmem>>, vector<2x32xf32>,
    %c0_58 = arith.constant 0 : index
    %c0_59 = arith.constant 0 : index
    %201 = vector.load %arg8[%c0_58, %c0_59] : memref<2x32xf32, #tpu.memory_space<vmem>>, vector<2x32xf32>
    tpu.vector_store %arg8[%c0_58, %c0_59], %197 {strides = array<i32>} : memref<2x32xf32, #tpu.memory_space<vmem>>, vector<2x32xf32>,
    %c0_60 = arith.constant 0 : index
    %c0_61 = arith.constant 0 : index
    %202 = vector.load %arg9[%c0_60, %c0_61] : memref<2x32xf32, #tpu.memory_space<vmem>>, vector<2x32xf32>
    tpu.vector_store %arg9[%c0_60, %c0_61], %195 {strides = array<i32>} : memref<2x32xf32, #tpu.memory_space<vmem>>, vector<2x32xf32>,
    return
  }
  func.func @transform_0(%arg0: i32) -> (i32, i32, i32) {
    %c0_i32 = arith.constant 0 : i32
    %c0_i32_0 = arith.constant 0 : i32
    %c0_i32_1 = arith.constant 0 : i32
    return %c0_i32, %arg0, %c0_i32_0 : i32, i32, i32
  }
  func.func @transform_1(%arg0: i32) -> (i32, i32) {
    %c0_i32 = arith.constant 0 : i32
    %c0_i32_0 = arith.constant 0 : i32
    %c0_i32_1 = arith.constant 0 : i32
    return %c0_i32, %c0_i32_0 : i32, i32
  }
  func.func @transform_2(%arg0: i32) -> (i32, i32) {
    %c0_i32 = arith.constant 0 : i32
    %c0_i32_0 = arith.constant 0 : i32
    %c0_i32_1 = arith.constant 0 : i32
    return %c0_i32, %c0_i32_0 : i32, i32
  }
  func.func @transform_3(%arg0: i32) -> (i32, i32) {
    %c0_i32 = arith.constant 0 : i32
    %c0_i32_0 = arith.constant 0 : i32
    %c0_i32_1 = arith.constant 0 : i32
    return %c0_i32, %c0_i32_0 : i32, i32
  }
  func.func @transform_4(%arg0: i32) -> (i32, i32) {
    %c0_i32 = arith.constant 0 : i32
    %c0_i32_0 = arith.constant 0 : i32
    %c0_i32_1 = arith.constant 0 : i32
    return %c0_i32, %c0_i32_0 : i32, i32
  }
  func.func @transform_5(%arg0: i32) -> (i32, i32) {
    %c0_i32 = arith.constant 0 : i32
    %c0_i32_0 = arith.constant 0 : i32
    %c0_i32_1 = arith.constant 0 : i32
    return %c0_i32, %c0_i32_0 : i32, i32
  }
  func.func @transform_6(%arg0: i32) -> (i32, i32) {
    %c0_i32 = arith.constant 0 : i32
    %c0_i32_0 = arith.constant 0 : i32
    return %c0_i32, %arg0 : i32, i32
  }
  func.func @transform_7(%arg0: i32) -> (i32, i32) {
    %c0_i32 = arith.constant 0 : i32
    %c0_i32_0 = arith.constant 0 : i32
    %c0_i32_1 = arith.constant 0 : i32
    return %c0_i32, %c0_i32_0 : i32, i32
  }
  func.func @transform_8(%arg0: i32) -> (i32, i32) {
    %c0_i32 = arith.constant 0 : i32
    %c0_i32_0 = arith.constant 0 : i32
    %c0_i32_1 = arith.constant 0 : i32
    return %c0_i32, %c0_i32_0 : i32, i32
  }
}

</mosaic_0001>

<llo_original>
// kernel: memory_module_forward.1
$region0: #{memory_module_forward.1}
  #allocation0 [shape = 'u32[]', space=smem, size = 0x4, offset = 0x4, fixed_abs, tag = 'smem constant byte address 0x4 - core index']
  #allocation1 [shape = 'u32[144,128]{1,0:T(1,128)}', space=vmem, size = 0x12000, scoped, tag = 'internal scratch']
  #allocation2 [shape = 'f32[2,32]{1,0:T(2,128)}', space=vmem, size = 0x400, scoped, tag = 'scratch operand']
  #allocation3 [shape = 'f32[2,32]{1,0:T(2,128)}', space=vmem, size = 0x400, scoped, tag = 'scratch operand']
  %s0 = inlined_call_operand.vmem [shape: f32[2,8,32], index: 0, kind: input, shape index: {}]
  %s1 = inlined_call_operand.vmem [shape: f32[32,128], index: 1, kind: input, shape index: {}]
  %s2 = inlined_call_operand.vmem [shape: f32[1,128], index: 2, kind: input, shape index: {}]
  %s3 = inlined_call_operand.vmem [shape: f32[2,32], index: 3, kind: input, shape index: {}]
  %s4 = inlined_call_operand.vmem [shape: f32[2,32], index: 4, kind: input, shape index: {}]
  %s5 = inlined_call_operand.vmem [shape: f32[32,128], index: 5, kind: input, shape index: {}]
  %s6 = inlined_call_operand.vmem [shape: f32[2,256], index: 6, kind: output, shape index: {0}]
  %s7 = inlined_call_operand.hbm [shape: f32[2,32], index: 7, kind: output, shape index: {1}]
  %s8 = inlined_call_operand.hbm [shape: f32[2,32], index: 8, kind: output, shape index: {2}]
  %9 = xla_tuple %s6, %s7, %s8
  %s10 = sld [smem:[#allocation0]]
  $region54: #{memory_module_forward.1} parent=0
    _
  %s12 = ssub.s32 1, %s10
  %s13 = scalar_select 0, %s12, %s10
  $region1: #{memory_module_forward.1} parent=0
    #allocation4 [shape = 'u8[1024]{0}', space=vmem, size = 0x400, scoped, tag = 'output window, operand 1, single buffered']
    #allocation5 [shape = 's32[1]{0}', space=sflag, size = 0x4, scoped, tag = 'scoped memory for memory_module_forward.1']
    #allocation6 [shape = 'u8[1024]{0}', space=vmem, size = 0x400, scoped, tag = 'output window, operand 2, single buffered']
    #allocation7 [shape = 's32[1]{0}', space=sflag, size = 0x4, scoped, tag = 'scoped memory for memory_module_forward.1']
    %14 = vsyncpa [#allocation5], 0
    %15 = vsyncpa [#allocation7], 0
    // Predicated region
    $region2: #{memory_module_forward.1} parent=1 // pred_check
      _
    $region3: #{memory_module_forward.1} parent=1 // pred_check_branch
      %17 = sbr.rel (0) target = $region5
    $region4: #{memory_module_forward.1} parent=1 // pred_region
      _
    $region5: #{memory_module_forward.1} parent=1 // pred_fallthru
      _
    // Predicated region
    $region6: #{memory_module_forward.1} parent=1 // pred_check
      _
    $region7: #{memory_module_forward.1} parent=1 // pred_check_branch
      %19 = sbr.rel (0) target = $region9
    $region8: #{memory_module_forward.1} parent=1 // pred_region
      _
    $region9: #{memory_module_forward.1} parent=1 // pred_fallthru
      _
    // Predicated region
    $region10: #{memory_module_forward.1} parent=1 // pred_check
      _
    $region11: #{memory_module_forward.1} parent=1 // pred_check_branch
      %21 = sbr.rel (0) target = $region13
    $region12: #{memory_module_forward.1} parent=1 // pred_region
      _
    $region13: #{memory_module_forward.1} parent=1 // pred_fallthru
      _
    // Predicated region
    $region14: #{memory_module_forward.1} parent=1 // pred_check
      _
    $region15: #{memory_module_forward.1} parent=1 // pred_check_branch
      %23 = sbr.rel (0) target = $region17
    $region16: #{memory_module_forward.1} parent=1 // pred_region
      _
    $region17: #{memory_module_forward.1} parent=1 // pred_fallthru
      _
    // Predicated region
    $region18: #{memory_module_forward.1} parent=1 // pred_check
      _
    $region19: #{memory_module_forward.1} parent=1 // pred_check_branch
      %25 = sbr.rel (0) target = $region21
    $region20: #{memory_module_forward.1} parent=1 // pred_region
      _
    $region21: #{memory_module_forward.1} parent=1 // pred_fallthru
      _
    // Predicated region
    $region22: #{memory_module_forward.1} parent=1 // pred_check
      _
    $region23: #{memory_module_forward.1} parent=1 // pred_check_branch
      %27 = sbr.rel (0) target = $region25
    $region24: #{memory_module_forward.1} parent=1 // pred_region
      _
    $region25: #{memory_module_forward.1} parent=1 // pred_fallthru
      _
    %p28 = scmp.eq.s32.totalorder 0, 0
    // Predicated region
    $region26: #{memory_module_forward.1} parent=1 // pred_check
      %p29 = pneg %p28
    $region27: #{memory_module_forward.1} parent=1 // pred_check_branch
      %31 = sbr.rel (%p29) target = $region29
    $region28: #{memory_module_forward.1} parent=1 // pred_region
      %v32 = vld [vmem:[%s3] sm:$0x3]
      %vm33 = vcmask 254976
      %34 = vst.msk [vmem:[#allocation2] sm:$0x3] %vm33, %v32
      %v35 = vld [vmem:[%s4] sm:$0x3]
      %36 = vst.msk [vmem:[#allocation3] sm:$0x3] %vm33, %v35
    $region29: #{memory_module_forward.1} parent=1 // pred_fallthru
      _
    %v37 = vld [vmem:[%s0] sm:$0xff]
    %v38 = vld [vmem:[%s0 + $0x8] sm:$0xff]
    %v39 = vld [vmem:[%s1] sm:$0xff]
    %v40 = vld [vmem:[%s1 + $0x8] sm:$0xff]
    %v41 = vld [vmem:[%s1 + $0x10] sm:$0xff]
    %v42 = vld [vmem:[%s1 + $0x18] sm:$0xff]
    %vm43 = vcmask 261120
    %v45 = vsel %vm43, %v37, 0
    %v48 = vsel %vm43, %v38, 0
    %50 = vmatprep.subr.mxu0 0.0
    %51 = vmatpush1.msra.mxu0 %v39
    %52 = vmatprep.subr.mxu0 0.0
    %53 = vmatpush1.msra.mxu0 %v40
    %54 = vmatprep.subr.mxu0 0.0
    %55 = vmatpush1.msra.mxu0 %v41
    %56 = vmatprep.subr.mxu0 0.0
    %57 = vmatpush1.msra.mxu0 %v42
    %58 = vmatprep.subr.mxu0 0.0
    %59 = vmatpush1.msra.mxu0 0.0
    %60 = vmatprep.subr.mxu0 0.0
    %61 = vmatpush1.msra.mxu0 0.0
    %62 = vmatprep.subr.mxu0 0.0
    %63 = vmatpush1.msra.mxu0 0.0
    %64 = vmatprep.subr.mxu0 0.0
    %65 = vmatpush1.msra.mxu0 0.0
    %66 = vmatprep.subr.mxu0 0.0
    %67 = vmatpush1.msra.mxu0 0.0
    %68 = vmatprep.subr.mxu0 0.0
    %69 = vmatpush1.msra.mxu0 0.0
    %70 = vmatprep.subr.mxu0 0.0
    %71 = vmatpush1.msra.mxu0 0.0
    %72 = vmatprep.subr.mxu0 0.0
    %73 = vmatpush1.msra.mxu0 0.0
    %74 = vmatprep.subr.mxu0 0.0
    %75 = vmatpush1.msra.mxu0 0.0
    %76 = vmatprep.subr.mxu0 0.0
    %77 = vmatpush1.msra.mxu0 0.0
    %78 = vmatprep.subr.mxu0 0.0
    %79 = vmatpush1.msra.mxu0 0.0
    %80 = vmatprep.subr.mxu0 0.0
    %81 = vmatpush1.msra.mxu0 0.0
    %82 = vmatprep.subr.mxu0 0.0
    %83 = vmatpush1.msra.mxu0 0.0
    %84 = vmatprep.subr.mxu0 0.0
    %85 = vmatpush1.msra.mxu0 0.0
    %86 = vmatprep.subr.mxu0 0.0
    %87 = vmatpush1.msra.mxu0 0.0
    %88 = vmatprep.subr.mxu0 0.0
    %89 = vmatpush1.msra.mxu0 0.0
    %90 = vmatprep.subr.mxu0 0.0
    %91 = vmatpush1.msra.mxu0 0.0
    %92 = vmatprep.subr.mxu0 0.0
    %93 = vmatpush1.msra.mxu0 0.0
    %94 = vmatprep.subr.mxu0 0.0
    %95 = vmatpush1.msra.mxu0 0.0
    %96 = vmatprep.subr.mxu0 0.0
    %97 = vmatpush1.msra.mxu0 0.0
    %98 = vmatprep.subr.mxu0 0.0
    %99 = vmatpush1.msra.mxu0 0.0
    %100 = vmatprep.subr.mxu0 0.0
    %101 = vmatpush1.msra.mxu0 0.0
    %102 = vmatprep.subr.mxu0 0.0
    %103 = vmatpush1.msra.mxu0 0.0
    %104 = vmatprep.subr.mxu0 0.0
    %105 = vmatpush1.msra.mxu0 0.0
    %106 = vmatprep.subr.mxu0 0.0
    %107 = vmatpush1.msra.mxu0 0.0
    %108 = vmatprep.subr.mxu0 0.0
    %109 = vmatpush1.msra.mxu0 0.0
    %110 = vmatprep.subr.mxu0 0.0
    %111 = vmatpush1.msra.mxu0 0.0
    %112 = vmatprep.subr.mxu0 0.0
    %113 = vmatpush1.msra.mxu0 0.0
    %114 = vmatprep.mubr.f32.mxu0 0.0
    %115 = vmatmul.mubr.f32.gmra.mrb[0].mxu0 %v45
    %v116 = vpop.f32.mrb[0].mxu0
    %v117 = vadd.f32 0.0, %v116
    %v118 = vpop.f32.mrb[0].mxu0
    %119 = vmatprep.mubr.f32.mxu0 0.0
    %120 = vmatmul.mubr.f32.gmra.mrb[0].mxu0 %v48
    %v121 = vpop.f32.mrb[0].mxu0
    %v122 = vadd.f32 0.0, %v121
    %v123 = vpop.f32.mrb[0].mxu0
    %124 = vdwg.mxu0
    %v125 = vld [vmem:[%s2] sm:$0x1]
    %v127 = vlaneseq
    %v128 = vshrl.u32 %v127, 7
    %v129 = vsub.s32 0, %v128
    %v130 = vrot.slane %v125, %v129
    %v132 = vadd.f32 %v117, %v130
    %v133 = vadd.f32 %v122, %v130
    %v134 = vld [vmem:[%s5] sm:$0xff]
    %v135 = vld [vmem:[%s5 + $0x8] sm:$0xff]
    %v136 = vld [vmem:[%s5 + $0x10] sm:$0xff]
    %v137 = vld [vmem:[%s5 + $0x18] sm:$0xff]
    %v138 = vld [vmem:[#allocation2] sm:$0x3]
    %v139 = vld [vmem:[#allocation3] sm:$0x3]
    %v141 = vsel %vm43, %v138, 0
    %143 = vmatprep.subr.mxu0 0.0
    %144 = vmatpush1.msra.mxu0 %v134
    %145 = vmatprep.subr.mxu0 0.0
    %146 = vmatpush1.msra.mxu0 %v135
    %147 = vmatprep.subr.mxu0 0.0
    %148 = vmatpush1.msra.mxu0 %v136
    %149 = vmatprep.subr.mxu0 0.0
    %150 = vmatpush1.msra.mxu0 %v137
    %151 = vmatprep.subr.mxu0 0.0
    %152 = vmatpush1.msra.mxu0 0.0
    %153 = vmatprep.subr.mxu0 0.0
    %154 = vmatpush1.msra.mxu0 0.0
    %155 = vmatprep.subr.mxu0 0.0
    %156 = vmatpush1.msra.mxu0 0.0
    %157 = vmatprep.subr.mxu0 0.0
    %158 = vmatpush1.msra.mxu0 0.0
    %159 = vmatprep.subr.mxu0 0.0
    %160 = vmatpush1.msra.mxu0 0.0
    %161 = vmatprep.subr.mxu0 0.0
    %162 = vmatpush1.msra.mxu0 0.0
    %163 = vmatprep.subr.mxu0 0.0
    %164 = vmatpush1.msra.mxu0 0.0
    %165 = vmatprep.subr.mxu0 0.0
    %166 = vmatpush1.msra.mxu0 0.0
    %167 = vmatprep.subr.mxu0 0.0
    %168 = vmatpush1.msra.mxu0 0.0
    %169 = vmatprep.subr.mxu0 0.0
    %170 = vmatpush1.msra.mxu0 0.0
    %171 = vmatprep.subr.mxu0 0.0
    %172 = vmatpush1.msra.mxu0 0.0
    %173 = vmatprep.subr.mxu0 0.0
    %174 = vmatpush1.msra.mxu0 0.0
    %175 = vmatprep.subr.mxu0 0.0
    %176 = vmatpush1.msra.mxu0 0.0
    %177 = vmatprep.subr.mxu0 0.0
    %178 = vmatpush1.msra.mxu0 0.0
    %179 = vmatprep.subr.mxu0 0.0
    %180 = vmatpush1.msra.mxu0 0.0
    %181 = vmatprep.subr.mxu0 0.0
    %182 = vmatpush1.msra.mxu0 0.0
    %183 = vmatprep.subr.mxu0 0.0
    %184 = vmatpush1.msra.mxu0 0.0
    %185 = vmatprep.subr.mxu0 0.0
    %186 = vmatpush1.msra.mxu0 0.0
    %187 = vmatprep.subr.mxu0 0.0
    %188 = vmatpush1.msra.mxu0 0.0
    %189 = vmatprep.subr.mxu0 0.0
    %190 = vmatpush1.msra.mxu0 0.0
    %191 = vmatprep.subr.mxu0 0.0
    %192 = vmatpush1.msra.mxu0 0.0
    %193 = vmatprep.subr.mxu0 0.0
    %194 = vmatpush1.msra.mxu0 0.0
    %195 = vmatprep.subr.mxu0 0.0
    %196 = vmatpush1.msra.mxu0 0.0
    %197 = vmatprep.subr.mxu0 0.0
    %198 = vmatpush1.msra.mxu0 0.0
    %199 = vmatprep.subr.mxu0 0.0
    %200 = vmatpush1.msra.mxu0 0.0
    %201 = vmatprep.subr.mxu0 0.0
    %202 = vmatpush1.msra.mxu0 0.0
    %203 = vmatprep.subr.mxu0 0.0
    %204 = vmatpush1.msra.mxu0 0.0
    %205 = vmatprep.subr.mxu0 0.0
    %206 = vmatpush1.msra.mxu0 0.0
    %207 = vmatprep.mubr.f32.mxu0 0.0
    %208 = vmatmul.mubr.f32.gmra.mrb[0].mxu0 %v141
    %v209 = vpop.f32.mrb[0].mxu0
    %v210 = vadd.f32 0.0, %v209
    %v211 = vpop.f32.mrb[0].mxu0
    %212 = vdwg.mxu0
    %v214 = vrot.slane %v210, 1
    %v217 = vadd.f32 %v132, %v210
    %v218 = vadd.f32 %v133, %v214
    %v219 = vxor.u32 %v217, 2147483648
    %v220 = vxor.u32 %v218, 2147483648
    %v221 = vmul.f32 %v219, 1.442695
    %v222 = vpow.pop %v221
    %v223 = vmul.f32 %v220, 1.442695
    %v224 = vpow.pop %v223
    %v225 = vadd.f32 %v222, 1.0
    %v226 = vadd.f32 %v224, 1.0
    %v227 = vrcp.pop %v225
    %v228 = vmul.f32 1.0, %v227
    %v229 = vrcp.pop %v226
    %v230 = vmul.f32 1.0, %v229
    %v231 = vmul.f32 %v228, 2.0
    %v232 = vmul.f32 %v230, 2.0
    %v233 = vsub.f32 %v231, 1.0
    %v234 = vsub.f32 %v232, 1.0
    %v236 = vrot.slane %v139, 1
    %237 = vrot.lane.b32.xlu0 %v139, 32
    %v238 = vpop.permute.xlu0 %237
    %239 = vrot.lane.b32.xlu0 %v236, 32
    %v240 = vpop.permute.xlu0 %239
    %v243 = vmul.f32 %v228, %v238
    %v244 = vmul.f32 %v230, %v240
    %247 = vrot.lane.b32.xlu0 %v233, 64
    %v248 = vpop.permute.xlu0 %247
    %249 = vrot.lane.b32.xlu0 %v234, 64
    %v250 = vpop.permute.xlu0 %249
    %v253 = vmul.f32 %v228, %v248
    %v254 = vmul.f32 %v230, %v250
    %257 = vrot.lane.b32.xlu0 %v253, 32
    %v258 = vpop.permute.xlu0 %257
    %259 = vrot.lane.b32.xlu0 %v254, 32
    %v260 = vpop.permute.xlu0 %259
    %v263 = vadd.f32 %v243, %v258
    %v264 = vadd.f32 %v244, %v260
    %v265 = vtanh.pop %v263
    %v266 = vtanh.pop %v264
    %269 = vrot.lane.b32.xlu0 %v265, 64
    %v270 = vpop.permute.xlu0 %269
    %271 = vrot.lane.b32.xlu0 %v266, 64
    %v272 = vpop.permute.xlu0 %271
    %v275 = vmul.f32 %v228, %v270
    %v276 = vmul.f32 %v230, %v272
    %v280 = vunpack.c.l.s4 1983009808
    %v281 = vunpack.c.0.s8 %v280
    %v282 = vlaneseq
    %v283 = vshrl.u32 %v282, 7
    %v284 = vsub.s32 %v281, %v283
    %v285 = vrot.slane %v275, %v284
    %v287 = vunpack.c.l.s4 1983009808
    %v288 = vunpack.c.0.s8 %v287
    %v289 = vlaneseq
    %v290 = vshrl.u32 %v289, 7
    %v291 = vsub.s32 %v288, %v290
    %v292 = vrot.slane %v276, %v291
    %vm293 = vcmask 1044484
    %v294 = vsel %vm293, %v285, %v285
    %vm295 = vcmask 1046534
    %v296 = vsel %vm295, %v285, %v294
    %v297 = vrot.slane %v292, 7
    %vm298 = vcmask 1041409
    %v299 = vsel %vm298, %v297, %v296
    %vm300 = vcmask 1043459
    %v301 = vsel %vm300, %v297, %v299
    %vm302 = vcmask 1045509
    %v303 = vsel %vm302, %v297, %v301
    %vm304 = vcmask 1047559
    %v305 = vsel %vm304, %v297, %v303
    %306 = vrot.lane.b32.xlu0 %v305, 32
    %v307 = vpop.permute.xlu0 %306
    %vm309 = vcmask 254976
    %310 = vst.msk [vmem:[%s6] sm:$0x3] %vm309, %v307
    %v311 = vrot.slane %v276, 7
    %v312 = vsel %vm298, %v311, %v275
    %313 = vrot.lane.b32.xlu0 %v312, 32
    %v314 = vpop.permute.xlu0 %313
    %v315 = vsel %vm43, %v314, 0
    %317 = vmatprep.subr.mxu0 0.0
    %318 = vmatpush1.msra.mxu0 %v134
    %319 = vmatprep.subr.mxu0 0.0
    %320 = vmatpush1.msra.mxu0 %v135
    %321 = vmatprep.subr.mxu0 0.0
    %322 = vmatpush1.msra.mxu0 %v136
    %323 = vmatprep.subr.mxu0 0.0
    %324 = vmatpush1.msra.mxu0 %v137
    %325 = vmatprep.subr.mxu0 0.0
    %326 = vmatpush1.msra.mxu0 0.0
    %327 = vmatprep.subr.mxu0 0.0
    %328 = vmatpush1.msra.mxu0 0.0
    %329 = vmatprep.subr.mxu0 0.0
    %330 = vmatpush1.msra.mxu0 0.0
    %331 = vmatprep.subr.mxu0 0.0
    %332 = vmatpush1.msra.mxu0 0.0
    %333 = vmatprep.subr.mxu0 0.0
    %334 = vmatpush1.msra.mxu0 0.0
    %335 = vmatprep.subr.mxu0 0.0
    %336 = vmatpush1.msra.mxu0 0.0
    %337 = vmatprep.subr.mxu0 0.0
    %338 = vmatpush1.msra.mxu0 0.0
    %339 = vmatprep.subr.mxu0 0.0
    %340 = vmatpush1.msra.mxu0 0.0
    %341 = vmatprep.subr.mxu0 0.0
    %342 = vmatpush1.msra.mxu0 0.0
    %343 = vmatprep.subr.mxu0 0.0
    %344 = vmatpush1.msra.mxu0 0.0
    %345 = vmatprep.subr.mxu0 0.0
    %346 = vmatpush1.msra.mxu0 0.0
    %347 = vmatprep.subr.mxu0 0.0
    %348 = vmatpush1.msra.mxu0 0.0
    %349 = vmatprep.subr.mxu0 0.0
    %350 = vmatpush1.msra.mxu0 0.0
    %351 = vmatprep.subr.mxu0 0.0
    %352 = vmatpush1.msra.mxu0 0.0
    %353 = vmatprep.subr.mxu0 0.0
    %354 = vmatpush1.msra.mxu0 0.0
    %355 = vmatprep.subr.mxu0 0.0
    %356 = vmatpush1.msra.mxu0 0.0
    %357 = vmatprep.subr.mxu0 0.0
    %358 = vmatpush1.msra.mxu0 0.0
    %359 = vmatprep.subr.mxu0 0.0
    %360 = vmatpush1.msra.mxu0 0.0
    %361 = vmatprep.subr.mxu0 0.0
    %362 = vmatpush1.msra.mxu0 0.0
    %363 = vmatprep.subr.mxu0 0.0
    %364 = vmatpush1.msra.mxu0 0.0
    %365 = vmatprep.subr.mxu0 0.0
    %366 = vmatpush1.msra.mxu0 0.0
    %367 = vmatprep.subr.mxu0 0.0
    %368 = vmatpush1.msra.mxu0 0.0
    %369 = vmatprep.subr.mxu0 0.0
    %370 = vmatpush1.msra.mxu0 0.0
    %371 = vmatprep.subr.mxu0 0.0
    %372 = vmatpush1.msra.mxu0 0.0
    %373 = vmatprep.subr.mxu0 0.0
    %374 = vmatpush1.msra.mxu0 0.0
    %375 = vmatprep.subr.mxu0 0.0
    %376 = vmatpush1.msra.mxu0 0.0
    %377 = vmatprep.subr.mxu0 0.0
    %378 = vmatpush1.msra.mxu0 0.0
    %379 = vmatprep.subr.mxu0 0.0
    %380 = vmatpush1.msra.mxu0 0.0
    %381 = vmatprep.mubr.f32.mxu0 0.0
    %382 = vmatmul.mubr.f32.gmra.mrb[0].mxu0 %v315
    %v383 = vpop.f32.mrb[0].mxu0
    %v384 = vadd.f32 0.0, %v383
    %v385 = vpop.f32.mrb[0].mxu0
    %386 = vdwg.mxu0
    %v388 = vrot.slane %v384, 7
    %v391 = vadd.f32 %v132, %v388
    %v392 = vadd.f32 %v133, %v384
    %v393 = vxor.u32 %v391, 2147483648
    %v394 = vxor.u32 %v392, 2147483648
    %v395 = vmul.f32 %v393, 1.442695
    %v396 = vpow.pop %v395
    %v397 = vmul.f32 %v394, 1.442695
    %v398 = vpow.pop %v397
    %v399 = vadd.f32 %v396, 1.0
    %v400 = vadd.f32 %v398, 1.0
    %v401 = vrcp.pop %v399
    %v402 = vmul.f32 1.0, %v401
    %v403 = vrcp.pop %v400
    %v404 = vmul.f32 1.0, %v403
    %v405 = vmul.f32 %v402, 2.0
    %v406 = vmul.f32 %v404, 2.0
    %v407 = vsub.f32 %v405, 1.0
    %v408 = vsub.f32 %v406, 1.0
    %v411 = vrot.slane %v263, 7
    %v412 = vrot.slane %v264, 7
    %v415 = vmul.f32 %v402, %v411
    %v416 = vmul.f32 %v404, %v412
    %419 = vrot.lane.b32.xlu0 %v407, 64
    %v420 = vpop.permute.xlu0 %419
    %421 = vrot.lane.b32.xlu0 %v408, 64
    %v422 = vpop.permute.xlu0 %421
    %v425 = vmul.f32 %v402, %v420
    %v426 = vmul.f32 %v404, %v422
    %429 = vrot.lane.b32.xlu0 %v425, 32
    %v430 = vpop.permute.xlu0 %429
    %431 = vrot.lane.b32.xlu0 %v426, 32
    %v432 = vpop.permute.xlu0 %431
    %v435 = vadd.f32 %v415, %v430
    %v436 = vadd.f32 %v416, %v432
    %v437 = vtanh.pop %v435
    %v438 = vtanh.pop %v436
    %441 = vrot.lane.b32.xlu0 %v437, 64
    %v442 = vpop.permute.xlu0 %441
    %443 = vrot.lane.b32.xlu0 %v438, 64
    %v444 = vpop.permute.xlu0 %443
    %v447 = vmul.f32 %v402, %v442
    %v448 = vmul.f32 %v404, %v444
    %v452 = vunpack.c.l.s4 1983009808
    %v453 = vunpack.c.0.s8 %v452
    %v454 = vlaneseq
    %v455 = vshrl.u32 %v454, 7
    %v456 = vsub.s32 %v453, %v455
    %v457 = vrot.slane %v447, %v456
    %v459 = vunpack.c.l.s4 1983009808
    %v460 = vunpack.c.0.s8 %v459
    %v461 = vlaneseq
    %v462 = vshrl.u32 %v461, 7
    %v463 = vsub.s32 %v460, %v462
    %v464 = vrot.slane %v448, %v463
    %v465 = vrot.slane %v457, 1
    %v466 = vsel %vm293, %v465, %v465
    %v467 = vsel %vm295, %v465, %v466
    %v468 = vsel %vm298, %v464, %v467
    %v469 = vsel %vm300, %v464, %v468
    %v470 = vsel %vm302, %v464, %v469
    %v471 = vsel %vm304, %v464, %v470
    %472 = vrot.lane.b32.xlu0 %v471, 64
    %v473 = vpop.permute.xlu0 %472
    %vm475 = vcmask 517376
    %476 = vst.msk [vmem:[%s6] sm:$0x3] %vm475, %v473
    %v477 = vrot.slane %v447, 1
    %v478 = vsel %vm298, %v448, %v477
    %479 = vrot.lane.b32.xlu0 %v478, 32
    %v480 = vpop.permute.xlu0 %479
    %v481 = vsel %vm43, %v480, 0
    %483 = vmatprep.subr.mxu0 0.0
    %484 = vmatpush1.msra.mxu0 %v134
    %485 = vmatprep.subr.mxu0 0.0
    %486 = vmatpush1.msra.mxu0 %v135
    %487 = vmatprep.subr.mxu0 0.0
    %488 = vmatpush1.msra.mxu0 %v136
    %489 = vmatprep.subr.mxu0 0.0
    %490 = vmatpush1.msra.mxu0 %v137
    %491 = vmatprep.subr.mxu0 0.0
    %492 = vmatpush1.msra.mxu0 0.0
    %493 = vmatprep.subr.mxu0 0.0
    %494 = vmatpush1.msra.mxu0 0.0
    %495 = vmatprep.subr.mxu0 0.0
    %496 = vmatpush1.msra.mxu0 0.0
    %497 = vmatprep.subr.mxu0 0.0
    %498 = vmatpush1.msra.mxu0 0.0
    %499 = vmatprep.subr.mxu0 0.0
    %500 = vmatpush1.msra.mxu0 0.0
    %501 = vmatprep.subr.mxu0 0.0
    %502 = vmatpush1.msra.mxu0 0.0
    %503 = vmatprep.subr.mxu0 0.0
    %504 = vmatpush1.msra.mxu0 0.0
    %505 = vmatprep.subr.mxu0 0.0
    %506 = vmatpush1.msra.mxu0 0.0
    %507 = vmatprep.subr.mxu0 0.0
    %508 = vmatpush1.msra.mxu0 0.0
    %509 = vmatprep.subr.mxu0 0.0
    %510 = vmatpush1.msra.mxu0 0.0
    %511 = vmatprep.subr.mxu0 0.0
    %512 = vmatpush1.msra.mxu0 0.0
    %513 = vmatprep.subr.mxu0 0.0
    %514 = vmatpush1.msra.mxu0 0.0
    %515 = vmatprep.subr.mxu0 0.0
    %516 = vmatpush1.msra.mxu0 0.0
    %517 = vmatprep.subr.mxu0 0.0
    %518 = vmatpush1.msra.mxu0 0.0
    %519 = vmatprep.subr.mxu0 0.0
    %520 = vmatpush1.msra.mxu0 0.0
    %521 = vmatprep.subr.mxu0 0.0
    %522 = vmatpush1.msra.mxu0 0.0
    %523 = vmatprep.subr.mxu0 0.0
    %524 = vmatpush1.msra.mxu0 0.0
    %525 = vmatprep.subr.mxu0 0.0
    %526 = vmatpush1.msra.mxu0 0.0
    %527 = vmatprep.subr.mxu0 0.0
    %528 = vmatpush1.msra.mxu0 0.0
    %529 = vmatprep.subr.mxu0 0.0
    %530 = vmatpush1.msra.mxu0 0.0
    %531 = vmatprep.subr.mxu0 0.0
    %532 = vmatpush1.msra.mxu0 0.0
    %533 = vmatprep.subr.mxu0 0.0
    %534 = vmatpush1.msra.mxu0 0.0
    %535 = vmatprep.subr.mxu0 0.0
    %536 = vmatpush1.msra.mxu0 0.0
    %537 = vmatprep.subr.mxu0 0.0
    %538 = vmatpush1.msra.mxu0 0.0
    %539 = vmatprep.subr.mxu0 0.0
    %540 = vmatpush1.msra.mxu0 0.0
    %541 = vmatprep.subr.mxu0 0.0
    %542 = vmatpush1.msra.mxu0 0.0
    %543 = vmatprep.subr.mxu0 0.0
    %544 = vmatpush1.msra.mxu0 0.0
    %545 = vmatprep.subr.mxu0 0.0
    %546 = vmatpush1.msra.mxu0 0.0
    %547 = vmatprep.mubr.f32.mxu0 0.0
    %548 = vmatmul.mubr.f32.gmra.mrb[0].mxu0 %v481
    %v549 = vpop.f32.mrb[0].mxu0
    %v550 = vadd.f32 0.0, %v549
    %v551 = vpop.f32.mrb[0].mxu0
    %552 = vdwg.mxu0
    %v554 = vrot.slane %v550, 6
    %v555 = vrot.slane %v550, 7
    %v558 = vadd.f32 %v132, %v554
    %v559 = vadd.f32 %v133, %v555
    %v560 = vxor.u32 %v558, 2147483648
    %v561 = vxor.u32 %v559, 2147483648
    %v562 = vmul.f32 %v560, 1.442695
    %v563 = vpow.pop %v562
    %v564 = vmul.f32 %v561, 1.442695
    %v565 = vpow.pop %v564
    %v566 = vadd.f32 %v563, 1.0
    %v567 = vadd.f32 %v565, 1.0
    %v568 = vrcp.pop %v566
    %v569 = vmul.f32 1.0, %v568
    %v570 = vrcp.pop %v567
    %v571 = vmul.f32 1.0, %v570
    %v572 = vmul.f32 %v569, 2.0
    %v573 = vmul.f32 %v571, 2.0
    %v574 = vsub.f32 %v572, 1.0
    %v575 = vsub.f32 %v573, 1.0
    %v578 = vrot.slane %v435, 7
    %v579 = vrot.slane %v436, 7
    %v582 = vmul.f32 %v569, %v578
    %v583 = vmul.f32 %v571, %v579
    %586 = vrot.lane.b32.xlu0 %v574, 64
    %v587 = vpop.permute.xlu0 %586
    %588 = vrot.lane.b32.xlu0 %v575, 64
    %v589 = vpop.permute.xlu0 %588
    %v592 = vmul.f32 %v569, %v587
    %v593 = vmul.f32 %v571, %v589
    %596 = vrot.lane.b32.xlu0 %v592, 32
    %v597 = vpop.permute.xlu0 %596
    %598 = vrot.lane.b32.xlu0 %v593, 32
    %v599 = vpop.permute.xlu0 %598
    %v602 = vadd.f32 %v582, %v597
    %v603 = vadd.f32 %v583, %v599
    %v604 = vtanh.pop %v602
    %v605 = vtanh.pop %v603
    %608 = vrot.lane.b32.xlu0 %v604, 64
    %v609 = vpop.permute.xlu0 %608
    %610 = vrot.lane.b32.xlu0 %v605, 64
    %v611 = vpop.permute.xlu0 %610
    %v614 = vmul.f32 %v569, %v609
    %v615 = vmul.f32 %v571, %v611
    %v619 = vunpack.c.l.s4 1983009808
    %v620 = vunpack.c.0.s8 %v619
    %v621 = vlaneseq
    %v622 = vshrl.u32 %v621, 7
    %v623 = vsub.s32 %v620, %v622
    %v624 = vrot.slane %v614, %v623
    %v625 = vcombine.high %v624, %v624
    %v627 = vunpack.c.l.s4 1983009808
    %v628 = vunpack.c.0.s8 %v627
    %v629 = vlaneseq
    %v630 = vshrl.u32 %v629, 7
    %v631 = vsub.s32 %v628, %v630
    %v632 = vrot.slane %v615, %v631
    %v633 = vcombine.high %v632, %v632
    %v634 = vsel %vm293, %v625, %v625
    %v635 = vsel %vm295, %v625, %v634
    %v636 = vrot.slane %v633, 7
    %v637 = vsel %vm298, %v636, %v635
    %v638 = vsel %vm300, %v636, %v637
    %v639 = vsel %vm302, %v636, %v638
    %v640 = vsel %vm304, %v636, %v639
    %641 = vrot.lane.b32.xlu0 %v640, 96
    %v642 = vpop.permute.xlu0 %641
    %vm644 = vcmask 779776
    %645 = vst.msk [vmem:[%s6] sm:$0x3] %vm644, %v642
    %v646 = vrot.slane %v614, 2
    %v647 = vrot.slane %v615, 1
    %v648 = vsel %vm298, %v647, %v646
    %649 = vrot.lane.b32.xlu0 %v648, 32
    %v650 = vpop.permute.xlu0 %649
    %v651 = vsel %vm43, %v650, 0
    %653 = vmatprep.subr.mxu0 0.0
    %654 = vmatpush1.msra.mxu0 %v134
    %655 = vmatprep.subr.mxu0 0.0
    %656 = vmatpush1.msra.mxu0 %v135
    %657 = vmatprep.subr.mxu0 0.0
    %658 = vmatpush1.msra.mxu0 %v136
    %659 = vmatprep.subr.mxu0 0.0
    %660 = vmatpush1.msra.mxu0 %v137
    %661 = vmatprep.subr.mxu0 0.0
    %662 = vmatpush1.msra.mxu0 0.0
    %663 = vmatprep.subr.mxu0 0.0
    %664 = vmatpush1.msra.mxu0 0.0
    %665 = vmatprep.subr.mxu0 0.0
    %666 = vmatpush1.msra.mxu0 0.0
    %667 = vmatprep.subr.mxu0 0.0
    %668 = vmatpush1.msra.mxu0 0.0
    %669 = vmatprep.subr.mxu0 0.0
    %670 = vmatpush1.msra.mxu0 0.0
    %671 = vmatprep.subr.mxu0 0.0
    %672 = vmatpush1.msra.mxu0 0.0
    %673 = vmatprep.subr.mxu0 0.0
    %674 = vmatpush1.msra.mxu0 0.0
    %675 = vmatprep.subr.mxu0 0.0
    %676 = vmatpush1.msra.mxu0 0.0
    %677 = vmatprep.subr.mxu0 0.0
    %678 = vmatpush1.msra.mxu0 0.0
    %679 = vmatprep.subr.mxu0 0.0
    %680 = vmatpush1.msra.mxu0 0.0
    %681 = vmatprep.subr.mxu0 0.0
    %682 = vmatpush1.msra.mxu0 0.0
    %683 = vmatprep.subr.mxu0 0.0
    %684 = vmatpush1.msra.mxu0 0.0
    %685 = vmatprep.subr.mxu0 0.0
    %686 = vmatpush1.msra.mxu0 0.0
    %687 = vmatprep.subr.mxu0 0.0
    %688 = vmatpush1.msra.mxu0 0.0
    %689 = vmatprep.subr.mxu0 0.0
    %690 = vmatpush1.msra.mxu0 0.0
    %691 = vmatprep.subr.mxu0 0.0
    %692 = vmatpush1.msra.mxu0 0.0
    %693 = vmatprep.subr.mxu0 0.0
    %694 = vmatpush1.msra.mxu0 0.0
    %695 = vmatprep.subr.mxu0 0.0
    %696 = vmatpush1.msra.mxu0 0.0
    %697 = vmatprep.subr.mxu0 0.0
    %698 = vmatpush1.msra.mxu0 0.0
    %699 = vmatprep.subr.mxu0 0.0
    %700 = vmatpush1.msra.mxu0 0.0
    %701 = vmatprep.subr.mxu0 0.0
    %702 = vmatpush1.msra.mxu0 0.0
    %703 = vmatprep.subr.mxu0 0.0
    %704 = vmatpush1.msra.mxu0 0.0
    %705 = vmatprep.subr.mxu0 0.0
    %706 = vmatpush1.msra.mxu0 0.0
    %707 = vmatprep.subr.mxu0 0.0
    %708 = vmatpush1.msra.mxu0 0.0
    %709 = vmatprep.subr.mxu0 0.0
    %710 = vmatpush1.msra.mxu0 0.0
    %711 = vmatprep.subr.mxu0 0.0
    %712 = vmatpush1.msra.mxu0 0.0
    %713 = vmatprep.subr.mxu0 0.0
    %714 = vmatpush1.msra.mxu0 0.0
    %715 = vmatprep.subr.mxu0 0.0
    %716 = vmatpush1.msra.mxu0 0.0
    %717 = vmatprep.mubr.f32.mxu0 0.0
    %718 = vmatmul.mubr.f32.gmra.mrb[0].mxu0 %v651
    %v719 = vpop.f32.mrb[0].mxu0
    %v720 = vadd.f32 0.0, %v719
    %v721 = vpop.f32.mrb[0].mxu0
    %722 = vdwg.mxu0
    %v724 = vrot.slane %v720, 5
    %v725 = vrot.slane %v720, 6
    %v728 = vadd.f32 %v132, %v724
    %v729 = vadd.f32 %v133, %v725
    %v730 = vxor.u32 %v728, 2147483648
    %v731 = vxor.u32 %v729, 2147483648
    %v732 = vmul.f32 %v730, 1.442695
    %v733 = vpow.pop %v732
    %v734 = vmul.f32 %v731, 1.442695
    %v735 = vpow.pop %v734
    %v736 = vadd.f32 %v733, 1.0
    %v737 = vadd.f32 %v735, 1.0
    %v738 = vrcp.pop %v736
    %v739 = vmul.f32 1.0, %v738
    %v740 = vrcp.pop %v737
    %v741 = vmul.f32 1.0, %v740
    %v742 = vmul.f32 %v739, 2.0
    %v743 = vmul.f32 %v741, 2.0
    %v744 = vsub.f32 %v742, 1.0
    %v745 = vsub.f32 %v743, 1.0
    %v748 = vrot.slane %v602, 7
    %v749 = vrot.slane %v603, 7
    %v752 = vmul.f32 %v739, %v748
    %v753 = vmul.f32 %v741, %v749
    %756 = vrot.lane.b32.xlu0 %v744, 64
    %v757 = vpop.permute.xlu0 %756
    %758 = vrot.lane.b32.xlu0 %v745, 64
    %v759 = vpop.permute.xlu0 %758
    %v762 = vmul.f32 %v739, %v757
    %v763 = vmul.f32 %v741, %v759
    %766 = vrot.lane.b32.xlu0 %v762, 32
    %v767 = vpop.permute.xlu0 %766
    %768 = vrot.lane.b32.xlu0 %v763, 32
    %v769 = vpop.permute.xlu0 %768
    %v772 = vadd.f32 %v752, %v767
    %v773 = vadd.f32 %v753, %v769
    %v774 = vtanh.pop %v772
    %v775 = vtanh.pop %v773
    %778 = vrot.lane.b32.xlu0 %v774, 64
    %v779 = vpop.permute.xlu0 %778
    %780 = vrot.lane.b32.xlu0 %v775, 64
    %v781 = vpop.permute.xlu0 %780
    %v784 = vmul.f32 %v739, %v779
    %v785 = vmul.f32 %v741, %v781
    %v789 = vunpack.c.l.s4 1983009808
    %v790 = vunpack.c.0.s8 %v789
    %v791 = vlaneseq
    %v792 = vshrl.u32 %v791, 7
    %v793 = vsub.s32 %v790, %v792
    %v794 = vrot.slane %v784, %v793
    %v795 = vcombine.high %v794, %v794
    %v797 = vunpack.c.l.s4 1983009808
    %v798 = vunpack.c.0.s8 %v797
    %v799 = vlaneseq
    %v800 = vshrl.u32 %v799, 7
    %v801 = vsub.s32 %v798, %v800
    %v802 = vrot.slane %v785, %v801
    %v803 = vcombine.high %v802, %v802
    %v804 = vrot.slane %v795, 1
    %v805 = vsel %vm293, %v804, %v804
    %v806 = vsel %vm295, %v804, %v805
    %v807 = vsel %vm298, %v803, %v806
    %v808 = vsel %vm300, %v803, %v807
    %v809 = vsel %vm302, %v803, %v808
    %v810 = vsel %vm304, %v803, %v809
    %vm812 = vcmask 1042176
    %813 = vst.msk [vmem:[%s6] sm:$0x3] %vm812, %v810
    %v814 = vrot.slane %v784, 3
    %v815 = vrot.slane %v785, 2
    %v816 = vsel %vm298, %v815, %v814
    %817 = vrot.lane.b32.xlu0 %v816, 32
    %v818 = vpop.permute.xlu0 %817
    %v819 = vsel %vm43, %v818, 0
    %821 = vmatprep.subr.mxu0 0.0
    %822 = vmatpush1.msra.mxu0 %v134
    %823 = vmatprep.subr.mxu0 0.0
    %824 = vmatpush1.msra.mxu0 %v135
    %825 = vmatprep.subr.mxu0 0.0
    %826 = vmatpush1.msra.mxu0 %v136
    %827 = vmatprep.subr.mxu0 0.0
    %828 = vmatpush1.msra.mxu0 %v137
    %829 = vmatprep.subr.mxu0 0.0
    %830 = vmatpush1.msra.mxu0 0.0
    %831 = vmatprep.subr.mxu0 0.0
    %832 = vmatpush1.msra.mxu0 0.0
    %833 = vmatprep.subr.mxu0 0.0
    %834 = vmatpush1.msra.mxu0 0.0
    %835 = vmatprep.subr.mxu0 0.0
    %836 = vmatpush1.msra.mxu0 0.0
    %837 = vmatprep.subr.mxu0 0.0
    %838 = vmatpush1.msra.mxu0 0.0
    %839 = vmatprep.subr.mxu0 0.0
    %840 = vmatpush1.msra.mxu0 0.0
    %841 = vmatprep.subr.mxu0 0.0
    %842 = vmatpush1.msra.mxu0 0.0
    %843 = vmatprep.subr.mxu0 0.0
    %844 = vmatpush1.msra.mxu0 0.0
    %845 = vmatprep.subr.mxu0 0.0
    %846 = vmatpush1.msra.mxu0 0.0
    %847 = vmatprep.subr.mxu0 0.0
    %848 = vmatpush1.msra.mxu0 0.0
    %849 = vmatprep.subr.mxu0 0.0
    %850 = vmatpush1.msra.mxu0 0.0
    %851 = vmatprep.subr.mxu0 0.0
    %852 = vmatpush1.msra.mxu0 0.0
    %853 = vmatprep.subr.mxu0 0.0
    %854 = vmatpush1.msra.mxu0 0.0
    %855 = vmatprep.subr.mxu0 0.0
    %856 = vmatpush1.msra.mxu0 0.0
    %857 = vmatprep.subr.mxu0 0.0
    %858 = vmatpush1.msra.mxu0 0.0
    %859 = vmatprep.subr.mxu0 0.0
    %860 = vmatpush1.msra.mxu0 0.0
    %861 = vmatprep.subr.mxu0 0.0
    %862 = vmatpush1.msra.mxu0 0.0
    %863 = vmatprep.subr.mxu0 0.0
    %864 = vmatpush1.msra.mxu0 0.0
    %865 = vmatprep.subr.mxu0 0.0
    %866 = vmatpush1.msra.mxu0 0.0
    %867 = vmatprep.subr.mxu0 0.0
    %868 = vmatpush1.msra.mxu0 0.0
    %869 = vmatprep.subr.mxu0 0.0
    %870 = vmatpush1.msra.mxu0 0.0
    %871 = vmatprep.subr.mxu0 0.0
    %872 = vmatpush1.msra.mxu0 0.0
    %873 = vmatprep.subr.mxu0 0.0
    %874 = vmatpush1.msra.mxu0 0.0
    %875 = vmatprep.subr.mxu0 0.0
    %876 = vmatpush1.msra.mxu0 0.0
    %877 = vmatprep.subr.mxu0 0.0
    %878 = vmatpush1.msra.mxu0 0.0
    %879 = vmatprep.subr.mxu0 0.0
    %880 = vmatpush1.msra.mxu0 0.0
    %881 = vmatprep.subr.mxu0 0.0
    %882 = vmatpush1.msra.mxu0 0.0
    %883 = vmatprep.subr.mxu0 0.0
    %884 = vmatpush1.msra.mxu0 0.0
    %885 = vmatprep.mubr.f32.mxu0 0.0
    %886 = vmatmul.mubr.f32.gmra.mrb[0].mxu0 %v819
    %v887 = vpop.f32.mrb[0].mxu0
    %v888 = vadd.f32 0.0, %v887
    %v889 = vpop.f32.mrb[0].mxu0
    %890 = vdwg.mxu0
    %v892 = vrot.slane %v888, 4
    %v893 = vrot.slane %v888, 5
    %v896 = vadd.f32 %v132, %v892
    %v897 = vadd.f32 %v133, %v893
    %v898 = vxor.u32 %v896, 2147483648
    %v899 = vxor.u32 %v897, 2147483648
    %v900 = vmul.f32 %v898, 1.442695
    %v901 = vpow.pop %v900
    %v902 = vmul.f32 %v899, 1.442695
    %v903 = vpow.pop %v902
    %v904 = vadd.f32 %v901, 1.0
    %v905 = vadd.f32 %v903, 1.0
    %v906 = vrcp.pop %v904
    %v907 = vmul.f32 1.0, %v906
    %v908 = vrcp.pop %v905
    %v909 = vmul.f32 1.0, %v908
    %v910 = vmul.f32 %v907, 2.0
    %v911 = vmul.f32 %v909, 2.0
    %v912 = vsub.f32 %v910, 1.0
    %v913 = vsub.f32 %v911, 1.0
    %v916 = vrot.slane %v772, 7
    %v917 = vrot.slane %v773, 7
    %v920 = vmul.f32 %v907, %v916
    %v921 = vmul.f32 %v909, %v917
    %924 = vrot.lane.b32.xlu0 %v912, 64
    %v925 = vpop.permute.xlu0 %924
    %926 = vrot.lane.b32.xlu0 %v913, 64
    %v927 = vpop.permute.xlu0 %926
    %v930 = vmul.f32 %v907, %v925
    %v931 = vmul.f32 %v909, %v927
    %934 = vrot.lane.b32.xlu0 %v930, 32
    %v935 = vpop.permute.xlu0 %934
    %936 = vrot.lane.b32.xlu0 %v931, 32
    %v937 = vpop.permute.xlu0 %936
    %v940 = vadd.f32 %v920, %v935
    %v941 = vadd.f32 %v921, %v937
    %v942 = vtanh.pop %v940
    %v943 = vtanh.pop %v941
    %946 = vrot.lane.b32.xlu0 %v942, 64
    %v947 = vpop.permute.xlu0 %946
    %948 = vrot.lane.b32.xlu0 %v943, 64
    %v949 = vpop.permute.xlu0 %948
    %v952 = vmul.f32 %v907, %v947
    %v953 = vmul.f32 %v909, %v949
    %v956 = vcombine.high %v952, %v952
    %v958 = vunpack.c.l.s4 1983009808
    %v959 = vunpack.c.0.s8 %v958
    %v960 = vlaneseq
    %v961 = vshrl.u32 %v960, 7
    %v962 = vsub.s32 %v959, %v961
    %v963 = vrot.slane %v956, %v962
    %v964 = vcombine.high %v953, %v953
    %v966 = vunpack.c.l.s4 1983009808
    %v967 = vunpack.c.0.s8 %v966
    %v968 = vlaneseq
    %v969 = vshrl.u32 %v968, 7
    %v970 = vsub.s32 %v967, %v969
    %v971 = vrot.slane %v964, %v970
    %v972 = vsel %vm293, %v963, %v963
    %v973 = vsel %vm295, %v963, %v972
    %v974 = vrot.slane %v971, 7
    %v975 = vsel %vm298, %v974, %v973
    %v976 = vsel %vm300, %v974, %v975
    %v977 = vsel %vm302, %v974, %v976
    %v978 = vsel %vm304, %v974, %v977
    %979 = vrot.lane.b32.xlu0 %v978, 32
    %v980 = vpop.permute.xlu0 %979
    %982 = vst.msk [vmem:[%s6 + $0x2] sm:$0x3] %vm309, %v980
    %v983 = vrot.slane %v952, 4
    %v984 = vrot.slane %v953, 3
    %v985 = vsel %vm298, %v984, %v983
    %986 = vrot.lane.b32.xlu0 %v985, 32
    %v987 = vpop.permute.xlu0 %986
    %v988 = vsel %vm43, %v987, 0
    %990 = vmatprep.subr.mxu0 0.0
    %991 = vmatpush1.msra.mxu0 %v134
    %992 = vmatprep.subr.mxu0 0.0
    %993 = vmatpush1.msra.mxu0 %v135
    %994 = vmatprep.subr.mxu0 0.0
    %995 = vmatpush1.msra.mxu0 %v136
    %996 = vmatprep.subr.mxu0 0.0
    %997 = vmatpush1.msra.mxu0 %v137
    %998 = vmatprep.subr.mxu0 0.0
    %999 = vmatpush1.msra.mxu0 0.0
    %1000 = vmatprep.subr.mxu0 0.0
    %1001 = vmatpush1.msra.mxu0 0.0
    %1002 = vmatprep.subr.mxu0 0.0
    %1003 = vmatpush1.msra.mxu0 0.0
    %1004 = vmatprep.subr.mxu0 0.0
    %1005 = vmatpush1.msra.mxu0 0.0
    %1006 = vmatprep.subr.mxu0 0.0
    %1007 = vmatpush1.msra.mxu0 0.0
    %1008 = vmatprep.subr.mxu0 0.0
    %1009 = vmatpush1.msra.mxu0 0.0
    %1010 = vmatprep.subr.mxu0 0.0
    %1011 = vmatpush1.msra.mxu0 0.0
    %1012 = vmatprep.subr.mxu0 0.0
    %1013 = vmatpush1.msra.mxu0 0.0
    %1014 = vmatprep.subr.mxu0 0.0
    %1015 = vmatpush1.msra.mxu0 0.0
    %1016 = vmatprep.subr.mxu0 0.0
    %1017 = vmatpush1.msra.mxu0 0.0
    %1018 = vmatprep.subr.mxu0 0.0
    %1019 = vmatpush1.msra.mxu0 0.0
    %1020 = vmatprep.subr.mxu0 0.0
    %1021 = vmatpush1.msra.mxu0 0.0
    %1022 = vmatprep.subr.mxu0 0.0
    %1023 = vmatpush1.msra.mxu0 0.0
    %1024 = vmatprep.subr.mxu0 0.0
    %1025 = vmatpush1.msra.mxu0 0.0
    %1026 = vmatprep.subr.mxu0 0.0
    %1027 = vmatpush1.msra.mxu0 0.0
    %1028 = vmatprep.subr.mxu0 0.0
    %1029 = vmatpush1.msra.mxu0 0.0
    %1030 = vmatprep.subr.mxu0 0.0
    %1031 = vmatpush1.msra.mxu0 0.0
    %1032 = vmatprep.subr.mxu0 0.0
    %1033 = vmatpush1.msra.mxu0 0.0
    %1034 = vmatprep.subr.mxu0 0.0
    %1035 = vmatpush1.msra.mxu0 0.0
    %1036 = vmatprep.subr.mxu0 0.0
    %1037 = vmatpush1.msra.mxu0 0.0
    %1038 = vmatprep.subr.mxu0 0.0
    %1039 = vmatpush1.msra.mxu0 0.0
    %1040 = vmatprep.subr.mxu0 0.0
    %1041 = vmatpush1.msra.mxu0 0.0
    %1042 = vmatprep.subr.mxu0 0.0
    %1043 = vmatpush1.msra.mxu0 0.0
    %1044 = vmatprep.subr.mxu0 0.0
    %1045 = vmatpush1.msra.mxu0 0.0
    %1046 = vmatprep.subr.mxu0 0.0
    %1047 = vmatpush1.msra.mxu0 0.0
    %1048 = vmatprep.subr.mxu0 0.0
    %1049 = vmatpush1.msra.mxu0 0.0
    %1050 = vmatprep.subr.mxu0 0.0
    %1051 = vmatpush1.msra.mxu0 0.0
    %1052 = vmatprep.subr.mxu0 0.0
    %1053 = vmatpush1.msra.mxu0 0.0
    %1054 = vmatprep.mubr.f32.mxu0 0.0
    %1055 = vmatmul.mubr.f32.gmra.mrb[0].mxu0 %v988
    %v1056 = vpop.f32.mrb[0].mxu0
    %v1057 = vadd.f32 0.0, %v1056
    %v1058 = vpop.f32.mrb[0].mxu0
    %1059 = vdwg.mxu0
    %v1061 = vrot.slane %v1057, 3
    %v1062 = vrot.slane %v1057, 4
    %v1065 = vadd.f32 %v132, %v1061
    %v1066 = vadd.f32 %v133, %v1062
    %v1067 = vxor.u32 %v1065, 2147483648
    %v1068 = vxor.u32 %v1066, 2147483648
    %v1069 = vmul.f32 %v1067, 1.442695
    %v1070 = vpow.pop %v1069
    %v1071 = vmul.f32 %v1068, 1.442695
    %v1072 = vpow.pop %v1071
    %v1073 = vadd.f32 %v1070, 1.0
    %v1074 = vadd.f32 %v1072, 1.0
    %v1075 = vrcp.pop %v1073
    %v1076 = vmul.f32 1.0, %v1075
    %v1077 = vrcp.pop %v1074
    %v1078 = vmul.f32 1.0, %v1077
    %v1079 = vmul.f32 %v1076, 2.0
    %v1080 = vmul.f32 %v1078, 2.0
    %v1081 = vsub.f32 %v1079, 1.0
    %v1082 = vsub.f32 %v1080, 1.0
    %v1085 = vrot.slane %v940, 7
    %v1086 = vrot.slane %v941, 7
    %v1089 = vmul.f32 %v1076, %v1085
    %v1090 = vmul.f32 %v1078, %v1086
    %1093 = vrot.lane.b32.xlu0 %v1081, 64
    %v1094 = vpop.permute.xlu0 %1093
    %1095 = vrot.lane.b32.xlu0 %v1082, 64
    %v1096 = vpop.permute.xlu0 %1095
    %v1099 = vmul.f32 %v1076, %v1094
    %v1100 = vmul.f32 %v1078, %v1096
    %1103 = vrot.lane.b32.xlu0 %v1099, 32
    %v1104 = vpop.permute.xlu0 %1103
    %1105 = vrot.lane.b32.xlu0 %v1100, 32
    %v1106 = vpop.permute.xlu0 %1105
    %v1109 = vadd.f32 %v1089, %v1104
    %v1110 = vadd.f32 %v1090, %v1106
    %v1111 = vtanh.pop %v1109
    %v1112 = vtanh.pop %v1110
    %1115 = vrot.lane.b32.xlu0 %v1111, 64
    %v1116 = vpop.permute.xlu0 %1115
    %1117 = vrot.lane.b32.xlu0 %v1112, 64
    %v1118 = vpop.permute.xlu0 %1117
    %v1121 = vmul.f32 %v1076, %v1116
    %v1122 = vmul.f32 %v1078, %v1118
    %v1125 = vcombine.high %v1121, %v1121
    %v1127 = vunpack.c.l.s4 1983009808
    %v1128 = vunpack.c.0.s8 %v1127
    %v1129 = vlaneseq
    %v1130 = vshrl.u32 %v1129, 7
    %v1131 = vsub.s32 %v1128, %v1130
    %v1132 = vrot.slane %v1125, %v1131
    %v1133 = vcombine.high %v1122, %v1122
    %v1135 = vunpack.c.l.s4 1983009808
    %v1136 = vunpack.c.0.s8 %v1135
    %v1137 = vlaneseq
    %v1138 = vshrl.u32 %v1137, 7
    %v1139 = vsub.s32 %v1136, %v1138
    %v1140 = vrot.slane %v1133, %v1139
    %v1141 = vrot.slane %v1132, 1
    %v1142 = vsel %vm293, %v1141, %v1141
    %v1143 = vsel %vm295, %v1141, %v1142
    %v1144 = vsel %vm298, %v1140, %v1143
    %v1145 = vsel %vm300, %v1140, %v1144
    %v1146 = vsel %vm302, %v1140, %v1145
    %v1147 = vsel %vm304, %v1140, %v1146
    %1148 = vrot.lane.b32.xlu0 %v1147, 64
    %v1149 = vpop.permute.xlu0 %1148
    %1151 = vst.msk [vmem:[%s6 + $0x2] sm:$0x3] %vm475, %v1149
    %v1152 = vrot.slane %v1121, 5
    %v1153 = vrot.slane %v1122, 4
    %v1154 = vsel %vm298, %v1153, %v1152
    %1155 = vrot.lane.b32.xlu0 %v1154, 32
    %v1156 = vpop.permute.xlu0 %1155
    %v1157 = vsel %vm43, %v1156, 0
    %1159 = vmatprep.subr.mxu0 0.0
    %1160 = vmatpush1.msra.mxu0 %v134
    %1161 = vmatprep.subr.mxu0 0.0
    %1162 = vmatpush1.msra.mxu0 %v135
    %1163 = vmatprep.subr.mxu0 0.0
    %1164 = vmatpush1.msra.mxu0 %v136
    %1165 = vmatprep.subr.mxu0 0.0
    %1166 = vmatpush1.msra.mxu0 %v137
    %1167 = vmatprep.subr.mxu0 0.0
    %1168 = vmatpush1.msra.mxu0 0.0
    %1169 = vmatprep.subr.mxu0 0.0
    %1170 = vmatpush1.msra.mxu0 0.0
    %1171 = vmatprep.subr.mxu0 0.0
    %1172 = vmatpush1.msra.mxu0 0.0
    %1173 = vmatprep.subr.mxu0 0.0
    %1174 = vmatpush1.msra.mxu0 0.0
    %1175 = vmatprep.subr.mxu0 0.0
    %1176 = vmatpush1.msra.mxu0 0.0
    %1177 = vmatprep.subr.mxu0 0.0
    %1178 = vmatpush1.msra.mxu0 0.0
    %1179 = vmatprep.subr.mxu0 0.0
    %1180 = vmatpush1.msra.mxu0 0.0
    %1181 = vmatprep.subr.mxu0 0.0
    %1182 = vmatpush1.msra.mxu0 0.0
    %1183 = vmatprep.subr.mxu0 0.0
    %1184 = vmatpush1.msra.mxu0 0.0
    %1185 = vmatprep.subr.mxu0 0.0
    %1186 = vmatpush1.msra.mxu0 0.0
    %1187 = vmatprep.subr.mxu0 0.0
    %1188 = vmatpush1.msra.mxu0 0.0
    %1189 = vmatprep.subr.mxu0 0.0
    %1190 = vmatpush1.msra.mxu0 0.0
    %1191 = vmatprep.subr.mxu0 0.0
    %1192 = vmatpush1.msra.mxu0 0.0
    %1193 = vmatprep.subr.mxu0 0.0
    %1194 = vmatpush1.msra.mxu0 0.0
    %1195 = vmatprep.subr.mxu0 0.0
    %1196 = vmatpush1.msra.mxu0 0.0
    %1197 = vmatprep.subr.mxu0 0.0
    %1198 = vmatpush1.msra.mxu0 0.0
    %1199 = vmatprep.subr.mxu0 0.0
    %1200 = vmatpush1.msra.mxu0 0.0
    %1201 = vmatprep.subr.mxu0 0.0
    %1202 = vmatpush1.msra.mxu0 0.0
    %1203 = vmatprep.subr.mxu0 0.0
    %1204 = vmatpush1.msra.mxu0 0.0
    %1205 = vmatprep.subr.mxu0 0.0
    %1206 = vmatpush1.msra.mxu0 0.0
    %1207 = vmatprep.subr.mxu0 0.0
    %1208 = vmatpush1.msra.mxu0 0.0
    %1209 = vmatprep.subr.mxu0 0.0
    %1210 = vmatpush1.msra.mxu0 0.0
    %1211 = vmatprep.subr.mxu0 0.0
    %1212 = vmatpush1.msra.mxu0 0.0
    %1213 = vmatprep.subr.mxu0 0.0
    %1214 = vmatpush1.msra.mxu0 0.0
    %1215 = vmatprep.subr.mxu0 0.0
    %1216 = vmatpush1.msra.mxu0 0.0
    %1217 = vmatprep.subr.mxu0 0.0
    %1218 = vmatpush1.msra.mxu0 0.0
    %1219 = vmatprep.subr.mxu0 0.0
    %1220 = vmatpush1.msra.mxu0 0.0
    %1221 = vmatprep.subr.mxu0 0.0
    %1222 = vmatpush1.msra.mxu0 0.0
    %1223 = vmatprep.mubr.f32.mxu0 0.0
    %1224 = vmatmul.mubr.f32.gmra.mrb[0].mxu0 %v1157
    %v1225 = vpop.f32.mrb[0].mxu0
    %v1226 = vadd.f32 0.0, %v1225
    %v1227 = vpop.f32.mrb[0].mxu0
    %1228 = vdwg.mxu0
    %v1230 = vrot.slane %v1226, 2
    %v1231 = vrot.slane %v1226, 3
    %v1234 = vadd.f32 %v132, %v1230
    %v1235 = vadd.f32 %v133, %v1231
    %v1236 = vxor.u32 %v1234, 2147483648
    %v1237 = vxor.u32 %v1235, 2147483648
    %v1238 = vmul.f32 %v1236, 1.442695
    %v1239 = vpow.pop %v1238
    %v1240 = vmul.f32 %v1237, 1.442695
    %v1241 = vpow.pop %v1240
    %v1242 = vadd.f32 %v1239, 1.0
    %v1243 = vadd.f32 %v1241, 1.0
    %v1244 = vrcp.pop %v1242
    %v1245 = vmul.f32 1.0, %v1244
    %v1246 = vrcp.pop %v1243
    %v1247 = vmul.f32 1.0, %v1246
    %v1248 = vmul.f32 %v1245, 2.0
    %v1249 = vmul.f32 %v1247, 2.0
    %v1250 = vsub.f32 %v1248, 1.0
    %v1251 = vsub.f32 %v1249, 1.0
    %v1254 = vrot.slane %v1109, 7
    %v1255 = vrot.slane %v1110, 7
    %v1258 = vmul.f32 %v1245, %v1254
    %v1259 = vmul.f32 %v1247, %v1255
    %1262 = vrot.lane.b32.xlu0 %v1250, 64
    %v1263 = vpop.permute.xlu0 %1262
    %1264 = vrot.lane.b32.xlu0 %v1251, 64
    %v1265 = vpop.permute.xlu0 %1264
    %v1268 = vmul.f32 %v1245, %v1263
    %v1269 = vmul.f32 %v1247, %v1265
    %1272 = vrot.lane.b32.xlu0 %v1268, 32
    %v1273 = vpop.permute.xlu0 %1272
    %1274 = vrot.lane.b32.xlu0 %v1269, 32
    %v1275 = vpop.permute.xlu0 %1274
    %v1278 = vadd.f32 %v1258, %v1273
    %v1279 = vadd.f32 %v1259, %v1275
    %v1280 = vtanh.pop %v1278
    %v1281 = vtanh.pop %v1279
    %1284 = vrot.lane.b32.xlu0 %v1280, 64
    %v1285 = vpop.permute.xlu0 %1284
    %1286 = vrot.lane.b32.xlu0 %v1281, 64
    %v1287 = vpop.permute.xlu0 %1286
    %v1290 = vmul.f32 %v1245, %v1285
    %v1291 = vmul.f32 %v1247, %v1287
    %v1294 = vcombine.high %v1290, %v1290
    %v1296 = vunpack.c.l.s4 1983009808
    %v1297 = vunpack.c.0.s8 %v1296
    %v1298 = vlaneseq
    %v1299 = vshrl.u32 %v1298, 7
    %v1300 = vsub.s32 %v1297, %v1299
    %v1301 = vrot.slane %v1294, %v1300
    %v1302 = vcombine.high %v1301, %v1301
    %v1303 = vcombine.high %v1291, %v1291
    %v1305 = vunpack.c.l.s4 1983009808
    %v1306 = vunpack.c.0.s8 %v1305
    %v1307 = vlaneseq
    %v1308 = vshrl.u32 %v1307, 7
    %v1309 = vsub.s32 %v1306, %v1308
    %v1310 = vrot.slane %v1303, %v1309
    %v1311 = vcombine.high %v1310, %v1310
    %v1312 = vsel %vm293, %v1302, %v1302
    %v1313 = vsel %vm295, %v1302, %v1312
    %v1314 = vrot.slane %v1311, 7
    %v1315 = vsel %vm298, %v1314, %v1313
    %v1316 = vsel %vm300, %v1314, %v1315
    %v1317 = vsel %vm302, %v1314, %v1316
    %v1318 = vsel %vm304, %v1314, %v1317
    %1319 = vrot.lane.b32.xlu0 %v1318, 96
    %v1320 = vpop.permute.xlu0 %1319
    %1322 = vst.msk [vmem:[%s6 + $0x2] sm:$0x3] %vm644, %v1320
    %v1323 = vrot.slane %v1290, 6
    %v1324 = vrot.slane %v1291, 5
    %v1325 = vsel %vm298, %v1324, %v1323
    %1326 = vrot.lane.b32.xlu0 %v1325, 32
    %v1327 = vpop.permute.xlu0 %1326
    %v1328 = vsel %vm43, %v1327, 0
    %1330 = vmatprep.subr.mxu0 0.0
    %1331 = vmatpush1.msra.mxu0 %v134
    %1332 = vmatprep.subr.mxu0 0.0
    %1333 = vmatpush1.msra.mxu0 %v135
    %1334 = vmatprep.subr.mxu0 0.0
    %1335 = vmatpush1.msra.mxu0 %v136
    %1336 = vmatprep.subr.mxu0 0.0
    %1337 = vmatpush1.msra.mxu0 %v137
    %1338 = vmatprep.subr.mxu0 0.0
    %1339 = vmatpush1.msra.mxu0 0.0
    %1340 = vmatprep.subr.mxu0 0.0
    %1341 = vmatpush1.msra.mxu0 0.0
    %1342 = vmatprep.subr.mxu0 0.0
    %1343 = vmatpush1.msra.mxu0 0.0
    %1344 = vmatprep.subr.mxu0 0.0
    %1345 = vmatpush1.msra.mxu0 0.0
    %1346 = vmatprep.subr.mxu0 0.0
    %1347 = vmatpush1.msra.mxu0 0.0
    %1348 = vmatprep.subr.mxu0 0.0
    %1349 = vmatpush1.msra.mxu0 0.0
    %1350 = vmatprep.subr.mxu0 0.0
    %1351 = vmatpush1.msra.mxu0 0.0
    %1352 = vmatprep.subr.mxu0 0.0
    %1353 = vmatpush1.msra.mxu0 0.0
    %1354 = vmatprep.subr.mxu0 0.0
    %1355 = vmatpush1.msra.mxu0 0.0
    %1356 = vmatprep.subr.mxu0 0.0
    %1357 = vmatpush1.msra.mxu0 0.0
    %1358 = vmatprep.subr.mxu0 0.0
    %1359 = vmatpush1.msra.mxu0 0.0
    %1360 = vmatprep.subr.mxu0 0.0
    %1361 = vmatpush1.msra.mxu0 0.0
    %1362 = vmatprep.subr.mxu0 0.0
    %1363 = vmatpush1.msra.mxu0 0.0
    %1364 = vmatprep.subr.mxu0 0.0
    %1365 = vmatpush1.msra.mxu0 0.0
    %1366 = vmatprep.subr.mxu0 0.0
    %1367 = vmatpush1.msra.mxu0 0.0
    %1368 = vmatprep.subr.mxu0 0.0
    %1369 = vmatpush1.msra.mxu0 0.0
    %1370 = vmatprep.subr.mxu0 0.0
    %1371 = vmatpush1.msra.mxu0 0.0
    %1372 = vmatprep.subr.mxu0 0.0
    %1373 = vmatpush1.msra.mxu0 0.0
    %1374 = vmatprep.subr.mxu0 0.0
    %1375 = vmatpush1.msra.mxu0 0.0
    %1376 = vmatprep.subr.mxu0 0.0
    %1377 = vmatpush1.msra.mxu0 0.0
    %1378 = vmatprep.subr.mxu0 0.0
    %1379 = vmatpush1.msra.mxu0 0.0
    %1380 = vmatprep.subr.mxu0 0.0
    %1381 = vmatpush1.msra.mxu0 0.0
    %1382 = vmatprep.subr.mxu0 0.0
    %1383 = vmatpush1.msra.mxu0 0.0
    %1384 = vmatprep.subr.mxu0 0.0
    %1385 = vmatpush1.msra.mxu0 0.0
    %1386 = vmatprep.subr.mxu0 0.0
    %1387 = vmatpush1.msra.mxu0 0.0
    %1388 = vmatprep.subr.mxu0 0.0
    %1389 = vmatpush1.msra.mxu0 0.0
    %1390 = vmatprep.subr.mxu0 0.0
    %1391 = vmatpush1.msra.mxu0 0.0
    %1392 = vmatprep.subr.mxu0 0.0
    %1393 = vmatpush1.msra.mxu0 0.0
    %1394 = vmatprep.mubr.f32.mxu0 0.0
    %1395 = vmatmul.mubr.f32.gmra.mrb[0].mxu0 %v1328
    %v1396 = vpop.f32.mrb[0].mxu0
    %v1397 = vadd.f32 0.0, %v1396
    %v1398 = vpop.f32.mrb[0].mxu0
    %1399 = vdwg.mxu0
    %v1401 = vrot.slane %v1397, 1
    %v1402 = vrot.slane %v1397, 2
    %v1405 = vadd.f32 %v132, %v1401
    %v1406 = vadd.f32 %v133, %v1402
    %v1407 = vxor.u32 %v1405, 2147483648
    %v1408 = vxor.u32 %v1406, 2147483648
    %v1409 = vmul.f32 %v1407, 1.442695
    %v1410 = vpow.pop %v1409
    %v1411 = vmul.f32 %v1408, 1.442695
    %v1412 = vpow.pop %v1411
    %v1413 = vadd.f32 %v1410, 1.0
    %v1414 = vadd.f32 %v1412, 1.0
    %v1415 = vrcp.pop %v1413
    %v1416 = vmul.f32 1.0, %v1415
    %v1417 = vrcp.pop %v1414
    %v1418 = vmul.f32 1.0, %v1417
    %v1419 = vmul.f32 %v1416, 2.0
    %v1420 = vmul.f32 %v1418, 2.0
    %v1421 = vsub.f32 %v1419, 1.0
    %v1422 = vsub.f32 %v1420, 1.0
    %v1425 = vrot.slane %v1278, 7
    %v1426 = vrot.slane %v1279, 7
    %v1429 = vmul.f32 %v1416, %v1425
    %v1430 = vmul.f32 %v1418, %v1426
    %1433 = vrot.lane.b32.xlu0 %v1421, 64
    %v1434 = vpop.permute.xlu0 %1433
    %1435 = vrot.lane.b32.xlu0 %v1422, 64
    %v1436 = vpop.permute.xlu0 %1435
    %v1439 = vmul.f32 %v1416, %v1434
    %v1440 = vmul.f32 %v1418, %v1436
    %1443 = vrot.lane.b32.xlu0 %v1439, 32
    %v1444 = vpop.permute.xlu0 %1443
    %1445 = vrot.lane.b32.xlu0 %v1440, 32
    %v1446 = vpop.permute.xlu0 %1445
    %v1449 = vadd.f32 %v1429, %v1444
    %v1450 = vadd.f32 %v1430, %v1446
    %v1451 = vtanh.pop %v1449
    %v1452 = vtanh.pop %v1450
    %1455 = vrot.lane.b32.xlu0 %v1451, 64
    %v1456 = vpop.permute.xlu0 %1455
    %1457 = vrot.lane.b32.xlu0 %v1452, 64
    %v1458 = vpop.permute.xlu0 %1457
    %v1461 = vmul.f32 %v1416, %v1456
    %v1462 = vmul.f32 %v1418, %v1458
    %v1465 = vcombine.high %v1461, %v1461
    %v1467 = vunpack.c.l.s4 1983009808
    %v1468 = vunpack.c.0.s8 %v1467
    %v1469 = vlaneseq
    %v1470 = vshrl.u32 %v1469, 7
    %v1471 = vsub.s32 %v1468, %v1470
    %v1472 = vrot.slane %v1465, %v1471
    %v1473 = vcombine.high %v1472, %v1472
    %v1474 = vcombine.high %v1462, %v1462
    %v1476 = vunpack.c.l.s4 1983009808
    %v1477 = vunpack.c.0.s8 %v1476
    %v1478 = vlaneseq
    %v1479 = vshrl.u32 %v1478, 7
    %v1480 = vsub.s32 %v1477, %v1479
    %v1481 = vrot.slane %v1474, %v1480
    %v1482 = vcombine.high %v1481, %v1481
    %v1483 = vrot.slane %v1473, 1
    %v1484 = vsel %vm293, %v1483, %v1483
    %v1485 = vsel %vm295, %v1483, %v1484
    %v1486 = vsel %vm298, %v1482, %v1485
    %v1487 = vsel %vm300, %v1482, %v1486
    %v1488 = vsel %vm302, %v1482, %v1487
    %v1489 = vsel %vm304, %v1482, %v1488
    %1491 = vst.msk [vmem:[%s6 + $0x2] sm:$0x3] %vm812, %v1489
    %v1492 = vrot.slane %v1462, 7
    %1493 = vrot.lane.b32.xlu0 %v1461, 32
    %v1494 = vpop.permute.xlu0 %1493
    %1495 = vrot.lane.b32.xlu0 %v1492, 32
    %v1496 = vpop.permute.xlu0 %1495
    %vm1499 = vcmask 261127
    %1500 = vst.msk [vmem:[#allocation2 - $0x7] sm:$0x80] %vm1499, %v1494
    %vm1501 = vcmask 253952
    %1502 = vst.msk [vmem:[#allocation2 + $0x1] sm:$0x1] %vm1501, %v1496
    %v1505 = vrot.slane %v1450, 7
    %1506 = vrot.lane.b32.xlu0 %v1449, 96
    %v1507 = vpop.permute.xlu0 %1506
    %1508 = vrot.lane.b32.xlu0 %v1505, 96
    %v1509 = vpop.permute.xlu0 %1508
    %1512 = vst.msk [vmem:[#allocation3 - $0x7] sm:$0x80] %vm1499, %v1507
    %1513 = vst.msk [vmem:[#allocation3 + $0x1] sm:$0x1] %vm1501, %v1509
    %1514 = vst.msk [vmem:[#allocation4 - $0x7] sm:$0x80] %vm1499, %v1494
    %1515 = vst.msk [vmem:[#allocation4 + $0x1] sm:$0x1] %vm1501, %v1496
    %1516 = vst.msk [vmem:[#allocation6 - $0x7] sm:$0x80] %vm1499, %v1507
    %1517 = vst.msk [vmem:[#allocation6 + $0x1] sm:$0x1] %vm1501, %v1509
    // Predicated region
    $region30: #{memory_module_forward.1} parent=1 // pred_check
      _
    $region31: #{memory_module_forward.1} parent=1 // pred_check_branch
      %1519 = sbr.rel (0) target = $region33
    $region32: #{memory_module_forward.1} parent=1 // pred_region
      _
    $region33: #{memory_module_forward.1} parent=1 // pred_fallthru
      _
    // Predicated region
    $region34: #{memory_module_forward.1} parent=1 // pred_check
      _
    $region35: #{memory_module_forward.1} parent=1 // pred_check_branch
      %1521 = sbr.rel (0) target = $region37
    $region36: #{memory_module_forward.1} parent=1 // pred_region
      %s1523 = ssub.s32 32, 32
      %1524 = vsyncadd [#allocation5], %s1523
      %s1526 = sshll.u32 [#allocation4], 4
      %s1527 = int_to_ptr.vmem [resolvable:$true] %s1526
      %1529 = dma.vmem_to_hbm [thread:$0]  %s1527, 32, %s7, [#allocation5]
    $region37: #{memory_module_forward.1} parent=1 // pred_fallthru
      _
    // Predicated region
    $region38: #{memory_module_forward.1} parent=1 // pred_check
      _
    $region39: #{memory_module_forward.1} parent=1 // pred_check_branch
      %1531 = sbr.rel (0) target = $region41
    $region40: #{memory_module_forward.1} parent=1 // pred_region
      %s1533 = ssub.s32 32, 32
      %1534 = vsyncadd [#allocation7], %s1533
      %s1536 = sshll.u32 [#allocation6], 4
      %s1537 = int_to_ptr.vmem [resolvable:$true] %s1536
      %1539 = dma.vmem_to_hbm [thread:$0]  %s1537, 32, %s8, [#allocation7]
    $region41: #{memory_module_forward.1} parent=1 // pred_fallthru
      _
    // Predicated region
    $region42: #{memory_module_forward.1} parent=1 // pred_check
      _
    $region43: #{memory_module_forward.1} parent=1 // pred_check_branch
      %1541 = sbr.rel (0) target = $region45
    $region44: #{memory_module_forward.1} parent=1 // pred_region
      _
    $region45: #{memory_module_forward.1} parent=1 // pred_fallthru
      _
    // Predicated region
    $region46: #{memory_module_forward.1} parent=1 // pred_check
      _
    $region47: #{memory_module_forward.1} parent=1 // pred_check_branch
      %1543 = sbr.rel (0) target = $region49
    $region48: #{memory_module_forward.1} parent=1 // pred_region
      %1544 = dma.done [#allocation5], 32
    $region49: #{memory_module_forward.1} parent=1 // pred_fallthru
      _
    // Predicated region
    $region50: #{memory_module_forward.1} parent=1 // pred_check
      _
    $region51: #{memory_module_forward.1} parent=1 // pred_check_branch
      %1546 = sbr.rel (0) target = $region53
    $region52: #{memory_module_forward.1} parent=1 // pred_region
      %1547 = dma.done [#allocation7], 32
    $region53: #{memory_module_forward.1} parent=1 // pred_fallthru
      _
    %1548 = vsyncpa [#allocation5], 1
    %1549 = vsyncpa [#allocation7], 1

</llo_original>
